<compile_context>
chip_gen: v7x
topology: tpu7x:2x2x1
jax: 0.10.0
libtpu: 0.0.40
codegen_flags: <defaults>
</compile_context>

<pallas_src>
import functools

import jax
import jax.numpy as jnp
from jax.experimental import pallas as pl
from jax.experimental.pallas import tpu as pltpu

# ----------------------------------------------------------------------------
# Model hyper-parameters (small, consistent with the module's __init__)
# ----------------------------------------------------------------------------
WINDOW_SIZE = 5
SEQ_LEN = WINDOW_SIZE + 3          # T = window_size + 3 (fc1 expects T * E)
VOCAB_SIZE = 32                    # V
EMBED_DIM = 16                     # E
HIDDEN_DIM = 32                    # H
DROPOUT_P = 0.5                    # unused at inference
BATCH = 250                        # B (batched so the grid/MXU actually fill)


def _round_up(x, m):
    return ((x + m - 1) // m) * m


# ----------------------------------------------------------------------------
# Kernel
# ----------------------------------------------------------------------------
def fcnn_kernel(tok_ref, m_ref, b1_ref, w2_ref, b2_ref, out_ref,
                *, seq_len, vocab):
    """Fused FCNN forward for one batch tile.

    tok_ref : (TILE_B, T)    int32  token ids (sublane-dense over batch)
    m_ref   : (T*V, H)       f32    fused embedding+fc1 weight (VMEM-resident)
    b1_ref  : (1, H)         f32    fc1 bias
    w2_ref  : (H, V)         f32    fc2 weight (in, out)
    b2_ref  : (1, V)         f32    fc2 bias
    out_ref : (TILE_B, V)    f32    logits
    """
    tile_b = tok_ref.shape[0]
    tv = seq_len * vocab

    tok = tok_ref[...]                                           # (TB, T) int32

    # One-hot over the fused (position, vocab) axis, built lane-dense directly
    # at width T*V -- no reshape / relayout.  Column c = t*V + v is hot iff
    # tok[b, t] == v, i.e. c == tok[b, t] + t*V.  The T blocks are disjoint so
    # a sum of indicators is exact.
    col = jax.lax.broadcasted_iota(jnp.int32, (tile_b, tv), 1)   # (TB, T*V)
    onehot = jnp.zeros((tile_b, tv), jnp.float32)
    for t in range(seq_len):                                     # T=8 VPU compares
        tgt = tok[:, t:t + 1] + (t * vocab)                      # (TB, 1)
        onehot = onehot + (col == tgt).astype(jnp.float32)

    # fc1 (fused with embedding) + bias + ReLU  -- single MXU matmul, K = T*V.
    h = jnp.dot(onehot, m_ref[...], preferred_element_type=jnp.float32)
    h = jnp.maximum(h + b1_ref[...], 0.0)                        # (TB, H)

    # Dropout: identity at inference.
    # TODO(synk): training-mode dropout (Bernoulli mask via pltpu.prng_*).

    # fc2
    out = jnp.dot(h, w2_ref[...], preferred_element_type=jnp.float32)
    out_ref[...] = out + b2_ref[...]                             # (TB, V)


# ----------------------------------------------------------------------------
# Wrapper
# ----------------------------------------------------------------------------
def prepare_params(params):
    """One-time weight folding (do this once per weight set, not per call).

    Fuses the embedding table into fc1:
      M[t*V + v, h] = sum_e emb[v, e] * w1[t*E + e, h]
    so the kernel never materializes per-token embeddings or reshapes them.
    """
    emb, w1, b1, w2, b2 = params
    V, E = emb.shape
    H = w1.shape[1]
    T = w1.shape[0] // E
    m_fused = jnp.einsum("ve,teh->tvh", emb, w1.reshape(T, E, H))
    m_fused = m_fused.reshape(T * V, H)                          # (T*V, H)
    return m_fused, b1.reshape(1, H), w2, b2.reshape(1, V)


def fcnn_forward(tokens, fused_params, *, tile_b=128):
    """tokens: (B, T) int32.  Returns logits (B, V) float32."""
    m_fused, b1, w2, b2 = fused_params
    TV, H = m_fused.shape
    V = b2.shape[1]
    T = TV // V
    B = tokens.shape[0]
    assert tokens.shape[1] == T, (tokens.shape, T)

    # Batch tiling: sublane-dense tiles, padded to a multiple of the tile.
    tile_b = min(tile_b, _round_up(max(B, 1), 8))
    b_pad = _round_up(B, tile_b)
    tok = tokens.astype(jnp.int32)
    if b_pad != B:
        tok = jnp.pad(tok, ((0, b_pad - B), (0, 0)))             # pad with id 0

    grid = (b_pad // tile_b,)
    kernel = functools.partial(fcnn_kernel, seq_len=T, vocab=V)

    # Advisory cost estimate (two matmuls dominate).
    flops = 2 * b_pad * (TV * H + H * V)
    bytes_accessed = 4 * (tok.size + m_fused.size + b1.size + w2.size
                          + b2.size + b_pad * V)

    out = pl.pallas_call(
        kernel,
        out_shape=jax.ShapeDtypeStruct((b_pad, V), jnp.float32),
        grid=grid,
        in_specs=[
            # tokens: blocked over batch
            pl.BlockSpec((tile_b, T), lambda i: (i, 0)),
            # weights / biases: constant index_map -> stay VMEM-resident
            pl.BlockSpec((TV, H), lambda i: (0, 0)),
            pl.BlockSpec((1, H), lambda i: (0, 0)),
            pl.BlockSpec((H, V), lambda i: (0, 0)),
            pl.BlockSpec((1, V), lambda i: (0, 0)),
        ],
        out_specs=pl.BlockSpec((tile_b, V), lambda i: (i, 0)),
        compiler_params=pltpu.CompilerParams(
            dimension_semantics=("parallel",)),   # shard batch grid on v7x 2TCs
        cost_estimate=pl.CostEstimate(
            flops=flops, transcendentals=0, bytes_accessed=bytes_accessed),
    )(tok, m_fused, b1, w2, b2)
    return out[:B]


# ----------------------------------------------------------------------------
# Params / reference
# ----------------------------------------------------------------------------
def init_params(key):
    """Deterministic parameter init (shapes match the PyTorch module)."""
    k_emb, k_w1, k_b1, k_w2, k_b2 = jax.random.split(key, 5)
    in1 = SEQ_LEN * EMBED_DIM
    emb = jax.random.normal(k_emb, (VOCAB_SIZE, EMBED_DIM), jnp.float32)
    # nn.Linear-style uniform(-1/sqrt(fan_in), 1/sqrt(fan_in)), stored (in, out)
    lim1 = 1.0 / jnp.sqrt(in1)
    w1 = jax.random.uniform(k_w1, (in1, HIDDEN_DIM), jnp.float32, -lim1, lim1)
    b1 = jax.random.uniform(k_b1, (HIDDEN_DIM,), jnp.float32, -lim1, lim1)
    lim2 = 1.0 / jnp.sqrt(HIDDEN_DIM)
    w2 = jax.random.uniform(k_w2, (HIDDEN_DIM, VOCAB_SIZE), jnp.float32, -lim2, lim2)
    b2 = jax.random.uniform(k_b2, (VOCAB_SIZE,), jnp.float32, -lim2, lim2)
    return emb, w1, b1, w2, b2


def fcnn_reference(tokens, params):
    """Pure-JAX reference of the PyTorch forward (eval mode), UNfused path."""
    emb, w1, b1, w2, b2 = params
    x = emb[tokens]                                  # (B, T, E) embedding gather
    x = x.reshape(tokens.shape[0], -1)               # view(B, -1)
    x = jnp.maximum(x @ w1 + b1, 0.0)                # fc1 + relu
    return x @ w2 + b2                               # fc2 (dropout = identity)


if __name__ == "__main__":
    key = jax.random.PRNGKey(0)
    k_tok, k_par = jax.random.split(key)
    params = init_params(k_par)
    tokens = jax.random.randint(k_tok, (BATCH, SEQ_LEN), 0, VOCAB_SIZE, jnp.int32)

    fused = prepare_params(params)                   # one-time weight folding
    out = fcnn_forward(tokens, fused)
    out = jax.block_until_ready(out)

    ref = fcnn_reference(tokens, params)
    assert out.shape == (BATCH, VOCAB_SIZE), out.shape
    assert jnp.allclose(out, ref, atol=1e-4, rtol=1e-4), (
        f"max abs err = {jnp.max(jnp.abs(out - ref))}")

    print("KERNEL_OK")
</pallas_src>

<mosaic_0001>
module attributes {stable_mosaic.version = 11 : i64} {
  func.func @fcnn_kernel(%arg0: i32, %arg1: memref<128x8xi32, #tpu.memory_space<vmem>>, %arg2: memref<256x32xf32, #tpu.memory_space<vmem>>, %arg3: memref<1x32xf32, #tpu.memory_space<vmem>>, %arg4: memref<32x32xf32, #tpu.memory_space<vmem>>, %arg5: memref<1x32xf32, #tpu.memory_space<vmem>>, %arg6: memref<128x32xf32, #tpu.memory_space<vmem>>) attributes {dimension_semantics = [#tpu.dimension_semantics<parallel>], iteration_bounds = array<i64: 2>, scalar_prefetch = 0 : i64, scratch_operands = 0 : i64, tpu.core_type = #tpu.core_type<tc>, window_params = [{transform_indices = @transform_0, window_bounds = array<i64: 128, 8>}, {pipeline_mode = #tpu.pipeline_mode<synchronous>, transform_indices = @transform_1, window_bounds = array<i64: 256, 32>}, {pipeline_mode = #tpu.pipeline_mode<synchronous>, transform_indices = @transform_2, window_bounds = array<i64: 1, 32>}, {pipeline_mode = #tpu.pipeline_mode<synchronous>, transform_indices = @transform_3, window_bounds = array<i64: 32, 32>}, {pipeline_mode = #tpu.pipeline_mode<synchronous>, transform_indices = @transform_4, window_bounds = array<i64: 1, 32>}, {transform_indices = @transform_5, window_bounds = array<i64: 128, 32>}]} {
    %c0 = arith.constant 0 : index
    %c0_0 = arith.constant 0 : index
    %0 = vector.load %arg1[%c0, %c0_0] : memref<128x8xi32, #tpu.memory_space<vmem>>, vector<128x8xi32>
    %1 = tpu.iota {dimensions = array<i32: 1>} : vector<128x256xi32>
    %cst = arith.constant 0.000000e+00 : f32
    %2 = vector.broadcast %cst : f32 to vector<128x256xf32>
    %3 = vector.extract_strided_slice %0 {offsets = [0, 0], sizes = [128, 1], strides = [1, 1]} : vector<128x8xi32> to vector<128x1xi32>
    %c0_i32 = arith.constant 0 : i32
    %4 = vector.broadcast %c0_i32 : i32 to vector<128x1xi32>
    %5 = arith.addi %3, %4 : vector<128x1xi32>
    %6 = vector.broadcast %5 : vector<128x1xi32> to vector<128x256xi32>
    %7 = arith.cmpi eq, %1, %6 : vector<128x256xi32>
    %8 = arith.extui %7 : vector<128x256xi1> to vector<128x256xi32>
    %9 = arith.sitofp %8 : vector<128x256xi32> to vector<128x256xf32>
    %10 = arith.addf %2, %9 : vector<128x256xf32>
    %11 = vector.extract_strided_slice %0 {offsets = [0, 1], sizes = [128, 1], strides = [1, 1]} : vector<128x8xi32> to vector<128x1xi32>
    %c32_i32 = arith.constant 32 : i32
    %12 = vector.broadcast %c32_i32 : i32 to vector<128x1xi32>
    %13 = arith.addi %11, %12 : vector<128x1xi32>
    %14 = vector.broadcast %13 : vector<128x1xi32> to vector<128x256xi32>
    %15 = arith.cmpi eq, %1, %14 : vector<128x256xi32>
    %16 = arith.extui %15 : vector<128x256xi1> to vector<128x256xi32>
    %17 = arith.sitofp %16 : vector<128x256xi32> to vector<128x256xf32>
    %18 = arith.addf %10, %17 : vector<128x256xf32>
    %19 = vector.extract_strided_slice %0 {offsets = [0, 2], sizes = [128, 1], strides = [1, 1]} : vector<128x8xi32> to vector<128x1xi32>
    %c64_i32 = arith.constant 64 : i32
    %20 = vector.broadcast %c64_i32 : i32 to vector<128x1xi32>
    %21 = arith.addi %19, %20 : vector<128x1xi32>
    %22 = vector.broadcast %21 : vector<128x1xi32> to vector<128x256xi32>
    %23 = arith.cmpi eq, %1, %22 : vector<128x256xi32>
    %24 = arith.extui %23 : vector<128x256xi1> to vector<128x256xi32>
    %25 = arith.sitofp %24 : vector<128x256xi32> to vector<128x256xf32>
    %26 = arith.addf %18, %25 : vector<128x256xf32>
    %27 = vector.extract_strided_slice %0 {offsets = [0, 3], sizes = [128, 1], strides = [1, 1]} : vector<128x8xi32> to vector<128x1xi32>
    %c96_i32 = arith.constant 96 : i32
    %28 = vector.broadcast %c96_i32 : i32 to vector<128x1xi32>
    %29 = arith.addi %27, %28 : vector<128x1xi32>
    %30 = vector.broadcast %29 : vector<128x1xi32> to vector<128x256xi32>
    %31 = arith.cmpi eq, %1, %30 : vector<128x256xi32>
    %32 = arith.extui %31 : vector<128x256xi1> to vector<128x256xi32>
    %33 = arith.sitofp %32 : vector<128x256xi32> to vector<128x256xf32>
    %34 = arith.addf %26, %33 : vector<128x256xf32>
    %35 = vector.extract_strided_slice %0 {offsets = [0, 4], sizes = [128, 1], strides = [1, 1]} : vector<128x8xi32> to vector<128x1xi32>
    %c128_i32 = arith.constant 128 : i32
    %36 = vector.broadcast %c128_i32 : i32 to vector<128x1xi32>
    %37 = arith.addi %35, %36 : vector<128x1xi32>
    %38 = vector.broadcast %37 : vector<128x1xi32> to vector<128x256xi32>
    %39 = arith.cmpi eq, %1, %38 : vector<128x256xi32>
    %40 = arith.extui %39 : vector<128x256xi1> to vector<128x256xi32>
    %41 = arith.sitofp %40 : vector<128x256xi32> to vector<128x256xf32>
    %42 = arith.addf %34, %41 : vector<128x256xf32>
    %43 = vector.extract_strided_slice %0 {offsets = [0, 5], sizes = [128, 1], strides = [1, 1]} : vector<128x8xi32> to vector<128x1xi32>
    %c160_i32 = arith.constant 160 : i32
    %44 = vector.broadcast %c160_i32 : i32 to vector<128x1xi32>
    %45 = arith.addi %43, %44 : vector<128x1xi32>
    %46 = vector.broadcast %45 : vector<128x1xi32> to vector<128x256xi32>
    %47 = arith.cmpi eq, %1, %46 : vector<128x256xi32>
    %48 = arith.extui %47 : vector<128x256xi1> to vector<128x256xi32>
    %49 = arith.sitofp %48 : vector<128x256xi32> to vector<128x256xf32>
    %50 = arith.addf %42, %49 : vector<128x256xf32>
    %51 = vector.extract_strided_slice %0 {offsets = [0, 6], sizes = [128, 1], strides = [1, 1]} : vector<128x8xi32> to vector<128x1xi32>
    %c192_i32 = arith.constant 192 : i32
    %52 = vector.broadcast %c192_i32 : i32 to vector<128x1xi32>
    %53 = arith.addi %51, %52 : vector<128x1xi32>
    %54 = vector.broadcast %53 : vector<128x1xi32> to vector<128x256xi32>
    %55 = arith.cmpi eq, %1, %54 : vector<128x256xi32>
    %56 = arith.extui %55 : vector<128x256xi1> to vector<128x256xi32>
    %57 = arith.sitofp %56 : vector<128x256xi32> to vector<128x256xf32>
    %58 = arith.addf %50, %57 : vector<128x256xf32>
    %59 = vector.extract_strided_slice %0 {offsets = [0, 7], sizes = [128, 1], strides = [1, 1]} : vector<128x8xi32> to vector<128x1xi32>
    %c224_i32 = arith.constant 224 : i32
    %60 = vector.broadcast %c224_i32 : i32 to vector<128x1xi32>
    %61 = arith.addi %59, %60 : vector<128x1xi32>
    %62 = vector.broadcast %61 : vector<128x1xi32> to vector<128x256xi32>
    %63 = arith.cmpi eq, %1, %62 : vector<128x256xi32>
    %64 = arith.extui %63 : vector<128x256xi1> to vector<128x256xi32>
    %65 = arith.sitofp %64 : vector<128x256xi32> to vector<128x256xf32>
    %66 = arith.addf %58, %65 : vector<128x256xf32>
    %c0_1 = arith.constant 0 : index
    %c0_2 = arith.constant 0 : index
    %67 = vector.load %arg2[%c0_1, %c0_2] : memref<256x32xf32, #tpu.memory_space<vmem>>, vector<256x32xf32>
    %cst_3 = arith.constant dense<0.000000e+00> : vector<128x32xf32>
    %68 = tpu.matmul %66, %67, %cst_3 {dimension_numbers = #tpu.dot_dimension_numbers<[1], [0], [0], [1], [0, 0, 1, 1], [], []>} : vector<128x256xf32>, vector<256x32xf32>, vector<128x32xf32> -> vector<128x32xf32>
    %c0_4 = arith.constant 0 : index
    %c0_5 = arith.constant 0 : index
    %69 = vector.load %arg3[%c0_4, %c0_5] : memref<1x32xf32, #tpu.memory_space<vmem>>, vector<1x32xf32>
    %70 = vector.broadcast %69 : vector<1x32xf32> to vector<128x32xf32>
    %71 = arith.addf %68, %70 : vector<128x32xf32>
    %cst_6 = arith.constant 0.000000e+00 : f32
    %72 = vector.broadcast %cst_6 : f32 to vector<128x32xf32>
    %73 = arith.maximumf %71, %72 : vector<128x32xf32>
    %c0_7 = arith.constant 0 : index
    %c0_8 = arith.constant 0 : index
    %74 = vector.load %arg4[%c0_7, %c0_8] : memref<32x32xf32, #tpu.memory_space<vmem>>, vector<32x32xf32>
    %cst_9 = arith.constant dense<0.000000e+00> : vector<128x32xf32>
    %75 = tpu.matmul %73, %74, %cst_9 {dimension_numbers = #tpu.dot_dimension_numbers<[1], [0], [0], [1], [0, 0, 1, 1], [], []>} : vector<128x32xf32>, vector<32x32xf32>, vector<128x32xf32> -> vector<128x32xf32>
    %c0_10 = arith.constant 0 : index
    %c0_11 = arith.constant 0 : index
    %76 = vector.load %arg5[%c0_10, %c0_11] : memref<1x32xf32, #tpu.memory_space<vmem>>, vector<1x32xf32>
    %77 = vector.broadcast %76 : vector<1x32xf32> to vector<128x32xf32>
    %78 = arith.addf %75, %77 : vector<128x32xf32>
    %c0_12 = arith.constant 0 : index
    %c0_13 = arith.constant 0 : index
    %79 = vector.load %arg6[%c0_12, %c0_13] : memref<128x32xf32, #tpu.memory_space<vmem>>, vector<128x32xf32>
    tpu.vector_store %arg6[%c0_12, %c0_13], %78 {strides = array<i32>} : memref<128x32xf32, #tpu.memory_space<vmem>>, vector<128x32xf32>,
    return
  }
  func.func @transform_0(%arg0: i32) -> (i32, i32) {
    %c0_i32 = arith.constant 0 : i32
    %c0_i32_0 = arith.constant 0 : i32
    return %arg0, %c0_i32 : i32, i32
  }
  func.func @transform_1(%arg0: i32) -> (i32, i32) {
    %c0_i32 = arith.constant 0 : i32
    %c0_i32_0 = arith.constant 0 : i32
    %c0_i32_1 = arith.constant 0 : i32
    return %c0_i32, %c0_i32_0 : i32, i32
  }
  func.func @transform_2(%arg0: i32) -> (i32, i32) {
    %c0_i32 = arith.constant 0 : i32
    %c0_i32_0 = arith.constant 0 : i32
    %c0_i32_1 = arith.constant 0 : i32
    return %c0_i32, %c0_i32_0 : i32, i32
  }
  func.func @transform_3(%arg0: i32) -> (i32, i32) {
    %c0_i32 = arith.constant 0 : i32
    %c0_i32_0 = arith.constant 0 : i32
    %c0_i32_1 = arith.constant 0 : i32
    return %c0_i32, %c0_i32_0 : i32, i32
  }
  func.func @transform_4(%arg0: i32) -> (i32, i32) {
    %c0_i32 = arith.constant 0 : i32
    %c0_i32_0 = arith.constant 0 : i32
    %c0_i32_1 = arith.constant 0 : i32
    return %c0_i32, %c0_i32_0 : i32, i32
  }
  func.func @transform_5(%arg0: i32) -> (i32, i32) {
    %c0_i32 = arith.constant 0 : i32
    %c0_i32_0 = arith.constant 0 : i32
    return %arg0, %c0_i32 : i32, i32
  }
}

</mosaic_0001>

<llo_original>
// kernel: tpu_custom_call.1
$region0: #{tpu_custom_call.1}
  #allocation0 [shape = 'u32[]', space=smem, size = 0x4, offset = 0x4, fixed_abs, tag = 'smem constant byte address 0x4 - core index']
  #allocation1 [shape = 'u32[144,128]{1,0:T(1,128)}', space=vmem, size = 0x12000, scoped, tag = 'internal scratch']
  %s0 = inlined_call_operand.vmem [shape: s32[256,8], index: 0, kind: input, shape index: {}]
  %s1 = inlined_call_operand.vmem [shape: f32[256,32], index: 1, kind: input, shape index: {}]
  %s2 = inlined_call_operand.vmem [shape: f32[1,32], index: 2, kind: input, shape index: {}]
  %s3 = inlined_call_operand.vmem [shape: f32[32,32], index: 3, kind: input, shape index: {}]
  %s4 = inlined_call_operand.vmem [shape: f32[1,32], index: 4, kind: input, shape index: {}]
  %s5 = inlined_call_operand.vmem [shape: f32[256,32], index: 5, kind: output, shape index: {}]
  %s6 = sld [smem:[#allocation0]]
  $region53: #{tpu_custom_call.1} parent=0
    _
  %s8 = ssub.s32 1, %s6
  %s9 = scalar_select 0, %s8, %s6
  loop: start=0, step=1, limit=4
  $region2: #{tpu_custom_call.1} parent=0 // loop_pre_header
    _
  $region3: #{tpu_custom_call.1} parent=0 // loop_header
    %s11 = sphi 0, %s15
    %p12 = scmp.ge.s32.totalorder %s11, 4
    %s21 = sphi 0, %s23
    %s24 = sphi 0, %s21
    %s25 = sphi 0, %s24
    %s41 = sphi 0, %s25
    %s45 = sphi 0, %s45
    %s47 = sphi 0, %s45
    %s48 = sphi 0, %s47
    %s62 = sphi 0, %s48
    %s66 = sphi 0, %s66
    %s68 = sphi 0, %s66
    %s69 = sphi 0, %s68
    %s83 = sphi 0, %s69
    %s87 = sphi 0, %s87
    %s89 = sphi 0, %s87
    %s90 = sphi 0, %s89
    %s104 = sphi 0, %s90
    %s108 = sphi 0, %s108
    %s110 = sphi 0, %s108
    %s111 = sphi 0, %s110
    %s125 = sphi 0, %s111
    %s131 = sphi 0, %s133
    %s134 = sphi 0, %s131
    %s135 = sphi 0, %s134
    %s151 = sphi 0, %s135
  $region4: #{tpu_custom_call.1} parent=0 // loop_header_branch
    %14 = sbr.rel (%p12) target = $region8
  $region5: #{tpu_custom_call.1} parent=0 // loop_body
    %s16 = ssub.s32 %s11, 1
    %s17 = ssub.s32 %s11, 2
    %s18 = sadd.s32 %s11, 1
    %s19 = ssub.s32 %s11, %s18
    %p20 = scmp.eq.s32.totalorder %s19, 0
    %s22 = sadd.s32 %s21, 1
    %s23 = scalar_select %p20, %s21, %s22
    %p26 = pneg %p20
    %p27 = scmp.eq.s32.totalorder %s11, 1
    %p28 = por %p26, %p27
    %p29 = scmp.ne.s32.totalorder %s21, %s24
    %p30 = scmp.eq.s32.totalorder %s11, 0
    %p31 = por %p29, %p30
    %p32 = scmp.ne.s32.totalorder %s21, %s24
    %p33 = scmp.eq.s32.totalorder %s16, 1
    %p34 = por %p32, %p33
    %p35 = scmp.ne.s32.totalorder %s24, %s25
    %p36 = scmp.eq.s32.totalorder %s16, 0
    %p37 = por %p35, %p36
    %p38 = scmp.ne.s32.totalorder %s24, %s25
    %p39 = scmp.eq.s32.totalorder %s17, 1
    %p40 = por %p38, %p39
    %p42 = scmp.ne.s32.totalorder %s25, %s41
    %p43 = scmp.eq.s32.totalorder %s17, 0
    %p44 = por %p42, %p43
    %s46 = sadd.s32 %s45, 1
    %p49 = scmp.eq.s32.totalorder %s11, 1
    %p50 = scmp.ne.s32.totalorder %s45, %s47
    %p51 = scmp.eq.s32.totalorder %s11, 0
    %p52 = por %p50, %p51
    %p53 = scmp.ne.s32.totalorder %s45, %s47
    %p54 = scmp.eq.s32.totalorder %s16, 1
    %p55 = por %p53, %p54
    %p56 = scmp.ne.s32.totalorder %s47, %s48
    %p57 = scmp.eq.s32.totalorder %s16, 0
    %p58 = por %p56, %p57
    %p59 = scmp.ne.s32.totalorder %s47, %s48
    %p60 = scmp.eq.s32.totalorder %s17, 1
    %p61 = por %p59, %p60
    %p63 = scmp.ne.s32.totalorder %s48, %s62
    %p64 = scmp.eq.s32.totalorder %s17, 0
    %p65 = por %p63, %p64
    %s67 = sadd.s32 %s66, 1
    %p70 = scmp.eq.s32.totalorder %s11, 1
    %p71 = scmp.ne.s32.totalorder %s66, %s68
    %p72 = scmp.eq.s32.totalorder %s11, 0
    %p73 = por %p71, %p72
    %p74 = scmp.ne.s32.totalorder %s66, %s68
    %p75 = scmp.eq.s32.totalorder %s16, 1
    %p76 = por %p74, %p75
    %p77 = scmp.ne.s32.totalorder %s68, %s69
    %p78 = scmp.eq.s32.totalorder %s16, 0
    %p79 = por %p77, %p78
    %p80 = scmp.ne.s32.totalorder %s68, %s69
    %p81 = scmp.eq.s32.totalorder %s17, 1
    %p82 = por %p80, %p81
    %p84 = scmp.ne.s32.totalorder %s69, %s83
    %p85 = scmp.eq.s32.totalorder %s17, 0
    %p86 = por %p84, %p85
    %s88 = sadd.s32 %s87, 1
    %p91 = scmp.eq.s32.totalorder %s11, 1
    %p92 = scmp.ne.s32.totalorder %s87, %s89
    %p93 = scmp.eq.s32.totalorder %s11, 0
    %p94 = por %p92, %p93
    %p95 = scmp.ne.s32.totalorder %s87, %s89
    %p96 = scmp.eq.s32.totalorder %s16, 1
    %p97 = por %p95, %p96
    %p98 = scmp.ne.s32.totalorder %s89, %s90
    %p99 = scmp.eq.s32.totalorder %s16, 0
    %p100 = por %p98, %p99
    %p101 = scmp.ne.s32.totalorder %s89, %s90
    %p102 = scmp.eq.s32.totalorder %s17, 1
    %p103 = por %p101, %p102
    %p105 = scmp.ne.s32.totalorder %s90, %s104
    %p106 = scmp.eq.s32.totalorder %s17, 0
    %p107 = por %p105, %p106
    %s109 = sadd.s32 %s108, 1
    %p112 = scmp.eq.s32.totalorder %s11, 1
    %p113 = scmp.ne.s32.totalorder %s108, %s110
    %p114 = scmp.eq.s32.totalorder %s11, 0
    %p115 = por %p113, %p114
    %p116 = scmp.ne.s32.totalorder %s108, %s110
    %p117 = scmp.eq.s32.totalorder %s16, 1
    %p118 = por %p116, %p117
    %p119 = scmp.ne.s32.totalorder %s110, %s111
    %p120 = scmp.eq.s32.totalorder %s16, 0
    %p121 = por %p119, %p120
    %p122 = scmp.ne.s32.totalorder %s110, %s111
    %p123 = scmp.eq.s32.totalorder %s17, 1
    %p124 = por %p122, %p123
    %p126 = scmp.ne.s32.totalorder %s111, %s125
    %p127 = scmp.eq.s32.totalorder %s17, 0
    %p128 = por %p126, %p127
    %s129 = ssub.s32 %s11, %s18
    %p130 = scmp.eq.s32.totalorder %s129, 0
    %s132 = sadd.s32 %s131, 1
    %s133 = scalar_select %p130, %s131, %s132
    %p136 = pneg %p130
    %p137 = scmp.eq.s32.totalorder %s11, 1
    %p138 = por %p136, %p137
    %p139 = scmp.ne.s32.totalorder %s131, %s134
    %p140 = scmp.eq.s32.totalorder %s11, 0
    %p141 = por %p139, %p140
    %p142 = scmp.ne.s32.totalorder %s131, %s134
    %p143 = scmp.eq.s32.totalorder %s16, 1
    %p144 = por %p142, %p143
    %p145 = scmp.ne.s32.totalorder %s134, %s135
    %p146 = scmp.eq.s32.totalorder %s16, 0
    %p147 = por %p145, %p146
    %p148 = scmp.ne.s32.totalorder %s134, %s135
    %p149 = scmp.eq.s32.totalorder %s17, 1
    %p150 = por %p148, %p149
    %p152 = scmp.ne.s32.totalorder %s135, %s151
    %p153 = scmp.eq.s32.totalorder %s17, 0
    %p154 = por %p152, %p153
    %p155 = scmp.le.s32.totalorder 1, %s11
    %p156 = scmp.lt.s32.totalorder %s11, 3
    %p157 = pnand %p155, %p156
    %p158 = pneg %p157
    // Predicated region
    $region9: #{tpu_custom_call.1} parent=5 // pred_check
      _
    $region10: #{tpu_custom_call.1} parent=5 // pred_check_branch
      %160 = sbr.rel (%p157) target = $region12
    $region11: #{tpu_custom_call.1} parent=5 // pred_region
      %s161 = ssub.s32 %s11, 1
      // Predicated region
      $region13: #{tpu_custom_call.1} parent=11 // pred_check
        %p162 = pneg %p58
      $region14: #{tpu_custom_call.1} parent=11 // pred_check_branch
        %164 = sbr.rel (%p162) target = $region16
      $region15: #{tpu_custom_call.1} parent=11 // pred_region
        _
      $region16: #{tpu_custom_call.1} parent=11 // pred_fallthru
        _
      // Predicated region
      $region17: #{tpu_custom_call.1} parent=11 // pred_check
        %p165 = pneg %p79
      $region18: #{tpu_custom_call.1} parent=11 // pred_check_branch
        %167 = sbr.rel (%p165) target = $region20
      $region19: #{tpu_custom_call.1} parent=11 // pred_region
        _
      $region20: #{tpu_custom_call.1} parent=11 // pred_fallthru
        _
      // Predicated region
      $region21: #{tpu_custom_call.1} parent=11 // pred_check
        %p168 = pneg %p100
      $region22: #{tpu_custom_call.1} parent=11 // pred_check_branch
        %170 = sbr.rel (%p168) target = $region24
      $region23: #{tpu_custom_call.1} parent=11 // pred_region
        _
      $region24: #{tpu_custom_call.1} parent=11 // pred_fallthru
        _
      // Predicated region
      $region25: #{tpu_custom_call.1} parent=11 // pred_check
        %p171 = pneg %p121
      $region26: #{tpu_custom_call.1} parent=11 // pred_check_branch
        %173 = sbr.rel (%p171) target = $region28
      $region27: #{tpu_custom_call.1} parent=11 // pred_region
        _
      $region28: #{tpu_custom_call.1} parent=11 // pred_fallthru
        _
    $region12: #{tpu_custom_call.1} parent=5 // pred_fallthru
      _
    %p174 = scmp.lt.s32.totalorder %s11, 2
    // Predicated region
    $region29: #{tpu_custom_call.1} parent=5 // pred_check
      %p175 = pneg %p174
    $region30: #{tpu_custom_call.1} parent=5 // pred_check_branch
      %177 = sbr.rel (%p175) target = $region32
    $region31: #{tpu_custom_call.1} parent=5 // pred_region
      // Predicated region
      $region33: #{tpu_custom_call.1} parent=31 // pred_check
        %p178 = pneg %p31
      $region34: #{tpu_custom_call.1} parent=31 // pred_check_branch
        %180 = sbr.rel (%p178) target = $region36
      $region35: #{tpu_custom_call.1} parent=31 // pred_region
        %s181 = smul.u32 16, %s11
        %p182 = scmp.lt.s32.totalorder %s181, 31
        %s183 = scalar_select %p182, %s181, 31
        %s184 = smul.addr %s183, 8
        %s185 = scalar_lea.vmem %s0, %s184
        %s186 = smul.u32 16, %s11
      $region36: #{tpu_custom_call.1} parent=31 // pred_fallthru
        _
    $region32: #{tpu_custom_call.1} parent=5 // pred_fallthru
      _
    %p187 = scmp.le.s32.totalorder 1, %s11
    %p188 = scmp.lt.s32.totalorder %s11, 3
    %p189 = pnand %p187, %p188
    %p190 = pneg %p189
    // Predicated region
    $region37: #{tpu_custom_call.1} parent=5 // pred_check
      _
    $region38: #{tpu_custom_call.1} parent=5 // pred_check_branch
      %192 = sbr.rel (%p189) target = $region40
    $region39: #{tpu_custom_call.1} parent=5 // pred_region
      %s193 = ssub.s32 %s11, 1
      %s194 = smul.u32 16, %s16
      %p195 = scmp.lt.s32.totalorder %s194, 31
      %s196 = scalar_select %p195, %s194, 31
      %s197 = smul.addr %s196, 8
      %s198 = scalar_lea.vmem %s0, %s197
      %p199 = pneg %p37
      %p200 = pneg %p34
      %p201 = pneg %p58
      %p202 = pneg %p55
      %p203 = pneg %p79
      %p204 = pneg %p76
      %p205 = pneg %p100
      %p206 = pneg %p97
      %p207 = pneg %p121
      %p208 = pneg %p118
      %p209 = pneg %p147
      %p210 = pneg %p144
      %s211 = smul.u32 16, %s16
      %p212 = scmp.lt.s32.totalorder %s211, 31
      %s213 = scalar_select %p212, %s211, 31
      %s214 = smul.addr %s213, 8
      %s215 = scalar_lea.vmem %s5, %s214
      %s216 = smul.u32 16, %s16
      %p217 = scmp.lt.s32.totalorder %s216, 31
      %s218 = scalar_select %p217, %s216, 31
      %s219 = smul.addr %s218, 8
      %s220 = scalar_lea.vmem %s0, %s219
      %s221 = smul.u32 16, %s16
      %s222 = smul.u32 16, %s16
      %p223 = scmp.lt.s32.totalorder %s222, 31
      %s224 = scalar_select %p223, %s222, 31
      %s225 = smul.addr %s224, 8
      %s226 = scalar_lea.vmem %s5, %s225
      %s227 = smul.u32 16, %s16
      %v228 = vld [vmem:[%s220] sm:$0xff]
      %v229 = vld [vmem:[%s220 + $0x8] sm:$0xff]
      %v230 = vld [vmem:[%s220 + $0x10] sm:$0xff]
      %v231 = vld [vmem:[%s220 + $0x18] sm:$0xff]
      %v232 = vld [vmem:[%s220 + $0x20] sm:$0xff]
      %v233 = vld [vmem:[%s220 + $0x28] sm:$0xff]
      %v234 = vld [vmem:[%s220 + $0x30] sm:$0xff]
      %v235 = vld [vmem:[%s220 + $0x38] sm:$0xff]
      %v236 = vld [vmem:[%s220 + $0x40] sm:$0xff]
      %v237 = vld [vmem:[%s220 + $0x48] sm:$0xff]
      %v238 = vld [vmem:[%s220 + $0x50] sm:$0xff]
      %v239 = vld [vmem:[%s220 + $0x58] sm:$0xff]
      %v240 = vld [vmem:[%s220 + $0x60] sm:$0xff]
      %v241 = vld [vmem:[%s220 + $0x68] sm:$0xff]
      %v242 = vld [vmem:[%s220 + $0x70] sm:$0xff]
      %v243 = vld [vmem:[%s220 + $0x78] sm:$0xff]
      %v244 = vlaneseq
      %v245 = vand.u32 %v244, 127
      %v246 = vadd.s32 %v245, 128
      %247 = vset.pattern.permute.xlu0 0
      %248 = vperm.xlu0 %247, %v228
      %v249 = vpop.permute.xlu0 %248
      %250 = vset.pattern.permute.xlu0 0
      %251 = vperm.xlu0 %250, %v229
      %v252 = vpop.permute.xlu0 %251
      %253 = vset.pattern.permute.xlu0 0
      %254 = vperm.xlu0 %253, %v230
      %v255 = vpop.permute.xlu0 %254
      %256 = vset.pattern.permute.xlu0 0
      %257 = vperm.xlu0 %256, %v231
      %v258 = vpop.permute.xlu0 %257
      %259 = vset.pattern.permute.xlu0 0
      %260 = vperm.xlu0 %259, %v232
      %v261 = vpop.permute.xlu0 %260
      %262 = vset.pattern.permute.xlu0 0
      %263 = vperm.xlu0 %262, %v233
      %v264 = vpop.permute.xlu0 %263
      %265 = vset.pattern.permute.xlu0 0
      %266 = vperm.xlu0 %265, %v234
      %v267 = vpop.permute.xlu0 %266
      %268 = vset.pattern.permute.xlu0 0
      %269 = vperm.xlu0 %268, %v235
      %v270 = vpop.permute.xlu0 %269
      %271 = vset.pattern.permute.xlu0 0
      %272 = vperm.xlu0 %271, %v236
      %v273 = vpop.permute.xlu0 %272
      %274 = vset.pattern.permute.xlu0 0
      %275 = vperm.xlu0 %274, %v237
      %v276 = vpop.permute.xlu0 %275
      %277 = vset.pattern.permute.xlu0 0
      %278 = vperm.xlu0 %277, %v238
      %v279 = vpop.permute.xlu0 %278
      %280 = vset.pattern.permute.xlu0 0
      %281 = vperm.xlu0 %280, %v239
      %v282 = vpop.permute.xlu0 %281
      %283 = vset.pattern.permute.xlu0 0
      %284 = vperm.xlu0 %283, %v240
      %v285 = vpop.permute.xlu0 %284
      %286 = vset.pattern.permute.xlu0 0
      %287 = vperm.xlu0 %286, %v241
      %v288 = vpop.permute.xlu0 %287
      %289 = vset.pattern.permute.xlu0 0
      %290 = vperm.xlu0 %289, %v242
      %v291 = vpop.permute.xlu0 %290
      %292 = vset.pattern.permute.xlu0 0
      %293 = vperm.xlu0 %292, %v243
      %v294 = vpop.permute.xlu0 %293
      %vm295 = vcmp.eq.s32.totalorder %v245, %v249
      %vm296 = vcmp.eq.s32.totalorder %v246, %v249
      %vm297 = vcmp.eq.s32.totalorder %v245, %v252
      %vm298 = vcmp.eq.s32.totalorder %v246, %v252
      %vm299 = vcmp.eq.s32.totalorder %v245, %v255
      %vm300 = vcmp.eq.s32.totalorder %v246, %v255
      %vm301 = vcmp.eq.s32.totalorder %v245, %v258
      %vm302 = vcmp.eq.s32.totalorder %v246, %v258
      %vm303 = vcmp.eq.s32.totalorder %v245, %v261
      %vm304 = vcmp.eq.s32.totalorder %v246, %v261
      %vm305 = vcmp.eq.s32.totalorder %v245, %v264
      %vm306 = vcmp.eq.s32.totalorder %v246, %v264
      %vm307 = vcmp.eq.s32.totalorder %v245, %v267
      %vm308 = vcmp.eq.s32.totalorder %v246, %v267
      %vm309 = vcmp.eq.s32.totalorder %v245, %v270
      %vm310 = vcmp.eq.s32.totalorder %v246, %v270
      %vm311 = vcmp.eq.s32.totalorder %v245, %v273
      %vm312 = vcmp.eq.s32.totalorder %v246, %v273
      %vm313 = vcmp.eq.s32.totalorder %v245, %v276
      %vm314 = vcmp.eq.s32.totalorder %v246, %v276
      %vm315 = vcmp.eq.s32.totalorder %v245, %v279
      %vm316 = vcmp.eq.s32.totalorder %v246, %v279
      %vm317 = vcmp.eq.s32.totalorder %v245, %v282
      %vm318 = vcmp.eq.s32.totalorder %v246, %v282
      %vm319 = vcmp.eq.s32.totalorder %v245, %v285
      %vm320 = vcmp.eq.s32.totalorder %v246, %v285
      %vm321 = vcmp.eq.s32.totalorder %v245, %v288
      %vm322 = vcmp.eq.s32.totalorder %v246, %v288
      %vm323 = vcmp.eq.s32.totalorder %v245, %v291
      %vm324 = vcmp.eq.s32.totalorder %v246, %v291
      %vm325 = vcmp.eq.s32.totalorder %v245, %v294
      %vm326 = vcmp.eq.s32.totalorder %v246, %v294
      %v327 = vsel %vm295, 1, 0
      %v328 = vsel %vm296, 1, 0
      %v329 = vsel %vm297, 1, 0
      %v330 = vsel %vm298, 1, 0
      %v331 = vsel %vm299, 1, 0
      %v332 = vsel %vm300, 1, 0
      %v333 = vsel %vm301, 1, 0
      %v334 = vsel %vm302, 1, 0
      %v335 = vsel %vm303, 1, 0
      %v336 = vsel %vm304, 1, 0
      %v337 = vsel %vm305, 1, 0
      %v338 = vsel %vm306, 1, 0
      %v339 = vsel %vm307, 1, 0
      %v340 = vsel %vm308, 1, 0
      %v341 = vsel %vm309, 1, 0
      %v342 = vsel %vm310, 1, 0
      %v343 = vsel %vm311, 1, 0
      %v344 = vsel %vm312, 1, 0
      %v345 = vsel %vm313, 1, 0
      %v346 = vsel %vm314, 1, 0
      %v347 = vsel %vm315, 1, 0
      %v348 = vsel %vm316, 1, 0
      %v349 = vsel %vm317, 1, 0
      %v350 = vsel %vm318, 1, 0
      %v351 = vsel %vm319, 1, 0
      %v352 = vsel %vm320, 1, 0
      %v353 = vsel %vm321, 1, 0
      %v354 = vsel %vm322, 1, 0
      %v355 = vsel %vm323, 1, 0
      %v356 = vsel %vm324, 1, 0
      %v357 = vsel %vm325, 1, 0
      %v358 = vsel %vm326, 1, 0
      %v359 = vcvt.s32.f32 %v327
      %v360 = vcvt.s32.f32 %v328
      %v361 = vcvt.s32.f32 %v329
      %v362 = vcvt.s32.f32 %v330
      %v363 = vcvt.s32.f32 %v331
      %v364 = vcvt.s32.f32 %v332
      %v365 = vcvt.s32.f32 %v333
      %v366 = vcvt.s32.f32 %v334
      %v367 = vcvt.s32.f32 %v335
      %v368 = vcvt.s32.f32 %v336
      %v369 = vcvt.s32.f32 %v337
      %v370 = vcvt.s32.f32 %v338
      %v371 = vcvt.s32.f32 %v339
      %v372 = vcvt.s32.f32 %v340
      %v373 = vcvt.s32.f32 %v341
      %v374 = vcvt.s32.f32 %v342
      %v375 = vcvt.s32.f32 %v343
      %v376 = vcvt.s32.f32 %v344
      %v377 = vcvt.s32.f32 %v345
      %v378 = vcvt.s32.f32 %v346
      %v379 = vcvt.s32.f32 %v347
      %v380 = vcvt.s32.f32 %v348
      %v381 = vcvt.s32.f32 %v349
      %v382 = vcvt.s32.f32 %v350
      %v383 = vcvt.s32.f32 %v351
      %v384 = vcvt.s32.f32 %v352
      %v385 = vcvt.s32.f32 %v353
      %v386 = vcvt.s32.f32 %v354
      %v387 = vcvt.s32.f32 %v355
      %v388 = vcvt.s32.f32 %v356
      %v389 = vcvt.s32.f32 %v357
      %v390 = vcvt.s32.f32 %v358
      %v391 = vadd.f32 %v359, 0.0
      %v392 = vadd.f32 %v360, 0.0
      %v393 = vadd.f32 %v361, 0.0
      %v394 = vadd.f32 %v362, 0.0
      %v395 = vadd.f32 %v363, 0.0
      %v396 = vadd.f32 %v364, 0.0
      %v397 = vadd.f32 %v365, 0.0
      %v398 = vadd.f32 %v366, 0.0
      %v399 = vadd.f32 %v367, 0.0
      %v400 = vadd.f32 %v368, 0.0
      %v401 = vadd.f32 %v369, 0.0
      %v402 = vadd.f32 %v370, 0.0
      %v403 = vadd.f32 %v371, 0.0
      %v404 = vadd.f32 %v372, 0.0
      %v405 = vadd.f32 %v373, 0.0
      %v406 = vadd.f32 %v374, 0.0
      %v407 = vadd.f32 %v375, 0.0
      %v408 = vadd.f32 %v376, 0.0
      %v409 = vadd.f32 %v377, 0.0
      %v410 = vadd.f32 %v378, 0.0
      %v411 = vadd.f32 %v379, 0.0
      %v412 = vadd.f32 %v380, 0.0
      %v413 = vadd.f32 %v381, 0.0
      %v414 = vadd.f32 %v382, 0.0
      %v415 = vadd.f32 %v383, 0.0
      %v416 = vadd.f32 %v384, 0.0
      %v417 = vadd.f32 %v385, 0.0
      %v418 = vadd.f32 %v386, 0.0
      %v419 = vadd.f32 %v387, 0.0
      %v420 = vadd.f32 %v388, 0.0
      %v421 = vadd.f32 %v389, 0.0
      %v422 = vadd.f32 %v390, 0.0
      %v423 = vadd.s32 %v228, 32
      %v424 = vadd.s32 %v229, 32
      %v425 = vadd.s32 %v230, 32
      %v426 = vadd.s32 %v231, 32
      %v427 = vadd.s32 %v232, 32
      %v428 = vadd.s32 %v233, 32
      %v429 = vadd.s32 %v234, 32
      %v430 = vadd.s32 %v235, 32
      %v431 = vadd.s32 %v236, 32
      %v432 = vadd.s32 %v237, 32
      %v433 = vadd.s32 %v238, 32
      %v434 = vadd.s32 %v239, 32
      %v435 = vadd.s32 %v240, 32
      %v436 = vadd.s32 %v241, 32
      %v437 = vadd.s32 %v242, 32
      %v438 = vadd.s32 %v243, 32
      %439 = vset.pattern.permute.xlu0 1
      %440 = vperm.xlu0 %439, %v423
      %v441 = vpop.permute.xlu0 %440
      %442 = vset.pattern.permute.xlu0 1
      %443 = vperm.xlu0 %442, %v424
      %v444 = vpop.permute.xlu0 %443
      %445 = vset.pattern.permute.xlu0 1
      %446 = vperm.xlu0 %445, %v425
      %v447 = vpop.permute.xlu0 %446
      %448 = vset.pattern.permute.xlu0 1
      %449 = vperm.xlu0 %448, %v426
      %v450 = vpop.permute.xlu0 %449
      %451 = vset.pattern.permute.xlu0 1
      %452 = vperm.xlu0 %451, %v427
      %v453 = vpop.permute.xlu0 %452
      %454 = vset.pattern.permute.xlu0 1
      %455 = vperm.xlu0 %454, %v428
      %v456 = vpop.permute.xlu0 %455
      %457 = vset.pattern.permute.xlu0 1
      %458 = vperm.xlu0 %457, %v429
      %v459 = vpop.permute.xlu0 %458
      %460 = vset.pattern.permute.xlu0 1
      %461 = vperm.xlu0 %460, %v430
      %v462 = vpop.permute.xlu0 %461
      %463 = vset.pattern.permute.xlu0 1
      %464 = vperm.xlu0 %463, %v431
      %v465 = vpop.permute.xlu0 %464
      %466 = vset.pattern.permute.xlu0 1
      %467 = vperm.xlu0 %466, %v432
      %v468 = vpop.permute.xlu0 %467
      %469 = vset.pattern.permute.xlu0 1
      %470 = vperm.xlu0 %469, %v433
      %v471 = vpop.permute.xlu0 %470
      %472 = vset.pattern.permute.xlu0 1
      %473 = vperm.xlu0 %472, %v434
      %v474 = vpop.permute.xlu0 %473
      %475 = vset.pattern.permute.xlu0 1
      %476 = vperm.xlu0 %475, %v435
      %v477 = vpop.permute.xlu0 %476
      %478 = vset.pattern.permute.xlu0 1
      %479 = vperm.xlu0 %478, %v436
      %v480 = vpop.permute.xlu0 %479
      %481 = vset.pattern.permute.xlu0 1
      %482 = vperm.xlu0 %481, %v437
      %v483 = vpop.permute.xlu0 %482
      %484 = vset.pattern.permute.xlu0 1
      %485 = vperm.xlu0 %484, %v438
      %v486 = vpop.permute.xlu0 %485
      %vm487 = vcmp.eq.s32.totalorder %v245, %v441
      %vm488 = vcmp.eq.s32.totalorder %v246, %v441
      %vm489 = vcmp.eq.s32.totalorder %v245, %v444
      %vm490 = vcmp.eq.s32.totalorder %v246, %v444
      %vm491 = vcmp.eq.s32.totalorder %v245, %v447
      %vm492 = vcmp.eq.s32.totalorder %v246, %v447
      %vm493 = vcmp.eq.s32.totalorder %v245, %v450
      %vm494 = vcmp.eq.s32.totalorder %v246, %v450
      %vm495 = vcmp.eq.s32.totalorder %v245, %v453
      %vm496 = vcmp.eq.s32.totalorder %v246, %v453
      %vm497 = vcmp.eq.s32.totalorder %v245, %v456
      %vm498 = vcmp.eq.s32.totalorder %v246, %v456
      %vm499 = vcmp.eq.s32.totalorder %v245, %v459
      %vm500 = vcmp.eq.s32.totalorder %v246, %v459
      %vm501 = vcmp.eq.s32.totalorder %v245, %v462
      %vm502 = vcmp.eq.s32.totalorder %v246, %v462
      %vm503 = vcmp.eq.s32.totalorder %v245, %v465
      %vm504 = vcmp.eq.s32.totalorder %v246, %v465
      %vm505 = vcmp.eq.s32.totalorder %v245, %v468
      %vm506 = vcmp.eq.s32.totalorder %v246, %v468
      %vm507 = vcmp.eq.s32.totalorder %v245, %v471
      %vm508 = vcmp.eq.s32.totalorder %v246, %v471
      %vm509 = vcmp.eq.s32.totalorder %v245, %v474
      %vm510 = vcmp.eq.s32.totalorder %v246, %v474
      %vm511 = vcmp.eq.s32.totalorder %v245, %v477
      %vm512 = vcmp.eq.s32.totalorder %v246, %v477
      %vm513 = vcmp.eq.s32.totalorder %v245, %v480
      %vm514 = vcmp.eq.s32.totalorder %v246, %v480
      %vm515 = vcmp.eq.s32.totalorder %v245, %v483
      %vm516 = vcmp.eq.s32.totalorder %v246, %v483
      %vm517 = vcmp.eq.s32.totalorder %v245, %v486
      %vm518 = vcmp.eq.s32.totalorder %v246, %v486
      %v519 = vsel %vm487, 1, 0
      %v520 = vsel %vm488, 1, 0
      %v521 = vsel %vm489, 1, 0
      %v522 = vsel %vm490, 1, 0
      %v523 = vsel %vm491, 1, 0
      %v524 = vsel %vm492, 1, 0
      %v525 = vsel %vm493, 1, 0
      %v526 = vsel %vm494, 1, 0
      %v527 = vsel %vm495, 1, 0
      %v528 = vsel %vm496, 1, 0
      %v529 = vsel %vm497, 1, 0
      %v530 = vsel %vm498, 1, 0
      %v531 = vsel %vm499, 1, 0
      %v532 = vsel %vm500, 1, 0
      %v533 = vsel %vm501, 1, 0
      %v534 = vsel %vm502, 1, 0
      %v535 = vsel %vm503, 1, 0
      %v536 = vsel %vm504, 1, 0
      %v537 = vsel %vm505, 1, 0
      %v538 = vsel %vm506, 1, 0
      %v539 = vsel %vm507, 1, 0
      %v540 = vsel %vm508, 1, 0
      %v541 = vsel %vm509, 1, 0
      %v542 = vsel %vm510, 1, 0
      %v543 = vsel %vm511, 1, 0
      %v544 = vsel %vm512, 1, 0
      %v545 = vsel %vm513, 1, 0
      %v546 = vsel %vm514, 1, 0
      %v547 = vsel %vm515, 1, 0
      %v548 = vsel %vm516, 1, 0
      %v549 = vsel %vm517, 1, 0
      %v550 = vsel %vm518, 1, 0
      %v551 = vcvt.s32.f32 %v519
      %v552 = vcvt.s32.f32 %v520
      %v553 = vcvt.s32.f32 %v521
      %v554 = vcvt.s32.f32 %v522
      %v555 = vcvt.s32.f32 %v523
      %v556 = vcvt.s32.f32 %v524
      %v557 = vcvt.s32.f32 %v525
      %v558 = vcvt.s32.f32 %v526
      %v559 = vcvt.s32.f32 %v527
      %v560 = vcvt.s32.f32 %v528
      %v561 = vcvt.s32.f32 %v529
      %v562 = vcvt.s32.f32 %v530
      %v563 = vcvt.s32.f32 %v531
      %v564 = vcvt.s32.f32 %v532
      %v565 = vcvt.s32.f32 %v533
      %v566 = vcvt.s32.f32 %v534
      %v567 = vcvt.s32.f32 %v535
      %v568 = vcvt.s32.f32 %v536
      %v569 = vcvt.s32.f32 %v537
      %v570 = vcvt.s32.f32 %v538
      %v571 = vcvt.s32.f32 %v539
      %v572 = vcvt.s32.f32 %v540
      %v573 = vcvt.s32.f32 %v541
      %v574 = vcvt.s32.f32 %v542
      %v575 = vcvt.s32.f32 %v543
      %v576 = vcvt.s32.f32 %v544
      %v577 = vcvt.s32.f32 %v545
      %v578 = vcvt.s32.f32 %v546
      %v579 = vcvt.s32.f32 %v547
      %v580 = vcvt.s32.f32 %v548
      %v581 = vcvt.s32.f32 %v549
      %v582 = vcvt.s32.f32 %v550
      %v583 = vadd.f32 %v391, %v551
      %v584 = vadd.f32 %v392, %v552
      %v585 = vadd.f32 %v393, %v553
      %v586 = vadd.f32 %v394, %v554
      %v587 = vadd.f32 %v395, %v555
      %v588 = vadd.f32 %v396, %v556
      %v589 = vadd.f32 %v397, %v557
      %v590 = vadd.f32 %v398, %v558
      %v591 = vadd.f32 %v399, %v559
      %v592 = vadd.f32 %v400, %v560
      %v593 = vadd.f32 %v401, %v561
      %v594 = vadd.f32 %v402, %v562
      %v595 = vadd.f32 %v403, %v563
      %v596 = vadd.f32 %v404, %v564
      %v597 = vadd.f32 %v405, %v565
      %v598 = vadd.f32 %v406, %v566
      %v599 = vadd.f32 %v407, %v567
      %v600 = vadd.f32 %v408, %v568
      %v601 = vadd.f32 %v409, %v569
      %v602 = vadd.f32 %v410, %v570
      %v603 = vadd.f32 %v411, %v571
      %v604 = vadd.f32 %v412, %v572
      %v605 = vadd.f32 %v413, %v573
      %v606 = vadd.f32 %v414, %v574
      %v607 = vadd.f32 %v415, %v575
      %v608 = vadd.f32 %v416, %v576
      %v609 = vadd.f32 %v417, %v577
      %v610 = vadd.f32 %v418, %v578
      %v611 = vadd.f32 %v419, %v579
      %v612 = vadd.f32 %v420, %v580
      %v613 = vadd.f32 %v421, %v581
      %v614 = vadd.f32 %v422, %v582
      %v615 = vadd.s32 %v228, 64
      %v616 = vadd.s32 %v229, 64
      %v617 = vadd.s32 %v230, 64
      %v618 = vadd.s32 %v231, 64
      %v619 = vadd.s32 %v232, 64
      %v620 = vadd.s32 %v233, 64
      %v621 = vadd.s32 %v234, 64
      %v622 = vadd.s32 %v235, 64
      %v623 = vadd.s32 %v236, 64
      %v624 = vadd.s32 %v237, 64
      %v625 = vadd.s32 %v238, 64
      %v626 = vadd.s32 %v239, 64
      %v627 = vadd.s32 %v240, 64
      %v628 = vadd.s32 %v241, 64
      %v629 = vadd.s32 %v242, 64
      %v630 = vadd.s32 %v243, 64
      %631 = vset.pattern.permute.xlu0 2
      %632 = vperm.xlu0 %631, %v615
      %v633 = vpop.permute.xlu0 %632
      %634 = vset.pattern.permute.xlu0 2
      %635 = vperm.xlu0 %634, %v616
      %v636 = vpop.permute.xlu0 %635
      %637 = vset.pattern.permute.xlu0 2
      %638 = vperm.xlu0 %637, %v617
      %v639 = vpop.permute.xlu0 %638
      %640 = vset.pattern.permute.xlu0 2
      %641 = vperm.xlu0 %640, %v618
      %v642 = vpop.permute.xlu0 %641
      %643 = vset.pattern.permute.xlu0 2
      %644 = vperm.xlu0 %643, %v619
      %v645 = vpop.permute.xlu0 %644
      %646 = vset.pattern.permute.xlu0 2
      %647 = vperm.xlu0 %646, %v620
      %v648 = vpop.permute.xlu0 %647
      %649 = vset.pattern.permute.xlu0 2
      %650 = vperm.xlu0 %649, %v621
      %v651 = vpop.permute.xlu0 %650
      %652 = vset.pattern.permute.xlu0 2
      %653 = vperm.xlu0 %652, %v622
      %v654 = vpop.permute.xlu0 %653
      %655 = vset.pattern.permute.xlu0 2
      %656 = vperm.xlu0 %655, %v623
      %v657 = vpop.permute.xlu0 %656
      %658 = vset.pattern.permute.xlu0 2
      %659 = vperm.xlu0 %658, %v624
      %v660 = vpop.permute.xlu0 %659
      %661 = vset.pattern.permute.xlu0 2
      %662 = vperm.xlu0 %661, %v625
      %v663 = vpop.permute.xlu0 %662
      %664 = vset.pattern.permute.xlu0 2
      %665 = vperm.xlu0 %664, %v626
      %v666 = vpop.permute.xlu0 %665
      %667 = vset.pattern.permute.xlu0 2
      %668 = vperm.xlu0 %667, %v627
      %v669 = vpop.permute.xlu0 %668
      %670 = vset.pattern.permute.xlu0 2
      %671 = vperm.xlu0 %670, %v628
      %v672 = vpop.permute.xlu0 %671
      %673 = vset.pattern.permute.xlu0 2
      %674 = vperm.xlu0 %673, %v629
      %v675 = vpop.permute.xlu0 %674
      %676 = vset.pattern.permute.xlu0 2
      %677 = vperm.xlu0 %676, %v630
      %v678 = vpop.permute.xlu0 %677
      %vm679 = vcmp.eq.s32.totalorder %v245, %v633
      %vm680 = vcmp.eq.s32.totalorder %v246, %v633
      %vm681 = vcmp.eq.s32.totalorder %v245, %v636
      %vm682 = vcmp.eq.s32.totalorder %v246, %v636
      %vm683 = vcmp.eq.s32.totalorder %v245, %v639
      %vm684 = vcmp.eq.s32.totalorder %v246, %v639
      %vm685 = vcmp.eq.s32.totalorder %v245, %v642
      %vm686 = vcmp.eq.s32.totalorder %v246, %v642
      %vm687 = vcmp.eq.s32.totalorder %v245, %v645
      %vm688 = vcmp.eq.s32.totalorder %v246, %v645
      %vm689 = vcmp.eq.s32.totalorder %v245, %v648
      %vm690 = vcmp.eq.s32.totalorder %v246, %v648
      %vm691 = vcmp.eq.s32.totalorder %v245, %v651
      %vm692 = vcmp.eq.s32.totalorder %v246, %v651
      %vm693 = vcmp.eq.s32.totalorder %v245, %v654
      %vm694 = vcmp.eq.s32.totalorder %v246, %v654
      %vm695 = vcmp.eq.s32.totalorder %v245, %v657
      %vm696 = vcmp.eq.s32.totalorder %v246, %v657
      %vm697 = vcmp.eq.s32.totalorder %v245, %v660
      %vm698 = vcmp.eq.s32.totalorder %v246, %v660
      %vm699 = vcmp.eq.s32.totalorder %v245, %v663
      %vm700 = vcmp.eq.s32.totalorder %v246, %v663
      %vm701 = vcmp.eq.s32.totalorder %v245, %v666
      %vm702 = vcmp.eq.s32.totalorder %v246, %v666
      %vm703 = vcmp.eq.s32.totalorder %v245, %v669
      %vm704 = vcmp.eq.s32.totalorder %v246, %v669
      %vm705 = vcmp.eq.s32.totalorder %v245, %v672
      %vm706 = vcmp.eq.s32.totalorder %v246, %v672
      %vm707 = vcmp.eq.s32.totalorder %v245, %v675
      %vm708 = vcmp.eq.s32.totalorder %v246, %v675
      %vm709 = vcmp.eq.s32.totalorder %v245, %v678
      %vm710 = vcmp.eq.s32.totalorder %v246, %v678
      %v711 = vsel %vm679, 1, 0
      %v712 = vsel %vm680, 1, 0
      %v713 = vsel %vm681, 1, 0
      %v714 = vsel %vm682, 1, 0
      %v715 = vsel %vm683, 1, 0
      %v716 = vsel %vm684, 1, 0
      %v717 = vsel %vm685, 1, 0
      %v718 = vsel %vm686, 1, 0
      %v719 = vsel %vm687, 1, 0
      %v720 = vsel %vm688, 1, 0
      %v721 = vsel %vm689, 1, 0
      %v722 = vsel %vm690, 1, 0
      %v723 = vsel %vm691, 1, 0
      %v724 = vsel %vm692, 1, 0
      %v725 = vsel %vm693, 1, 0
      %v726 = vsel %vm694, 1, 0
      %v727 = vsel %vm695, 1, 0
      %v728 = vsel %vm696, 1, 0
      %v729 = vsel %vm697, 1, 0
      %v730 = vsel %vm698, 1, 0
      %v731 = vsel %vm699, 1, 0
      %v732 = vsel %vm700, 1, 0
      %v733 = vsel %vm701, 1, 0
      %v734 = vsel %vm702, 1, 0
      %v735 = vsel %vm703, 1, 0
      %v736 = vsel %vm704, 1, 0
      %v737 = vsel %vm705, 1, 0
      %v738 = vsel %vm706, 1, 0
      %v739 = vsel %vm707, 1, 0
      %v740 = vsel %vm708, 1, 0
      %v741 = vsel %vm709, 1, 0
      %v742 = vsel %vm710, 1, 0
      %v743 = vcvt.s32.f32 %v711
      %v744 = vcvt.s32.f32 %v712
      %v745 = vcvt.s32.f32 %v713
      %v746 = vcvt.s32.f32 %v714
      %v747 = vcvt.s32.f32 %v715
      %v748 = vcvt.s32.f32 %v716
      %v749 = vcvt.s32.f32 %v717
      %v750 = vcvt.s32.f32 %v718
      %v751 = vcvt.s32.f32 %v719
      %v752 = vcvt.s32.f32 %v720
      %v753 = vcvt.s32.f32 %v721
      %v754 = vcvt.s32.f32 %v722
      %v755 = vcvt.s32.f32 %v723
      %v756 = vcvt.s32.f32 %v724
      %v757 = vcvt.s32.f32 %v725
      %v758 = vcvt.s32.f32 %v726
      %v759 = vcvt.s32.f32 %v727
      %v760 = vcvt.s32.f32 %v728
      %v761 = vcvt.s32.f32 %v729
      %v762 = vcvt.s32.f32 %v730
      %v763 = vcvt.s32.f32 %v731
      %v764 = vcvt.s32.f32 %v732
      %v765 = vcvt.s32.f32 %v733
      %v766 = vcvt.s32.f32 %v734
      %v767 = vcvt.s32.f32 %v735
      %v768 = vcvt.s32.f32 %v736
      %v769 = vcvt.s32.f32 %v737
      %v770 = vcvt.s32.f32 %v738
      %v771 = vcvt.s32.f32 %v739
      %v772 = vcvt.s32.f32 %v740
      %v773 = vcvt.s32.f32 %v741
      %v774 = vcvt.s32.f32 %v742
      %v775 = vadd.f32 %v583, %v743
      %v776 = vadd.f32 %v584, %v744
      %v777 = vadd.f32 %v585, %v745
      %v778 = vadd.f32 %v586, %v746
      %v779 = vadd.f32 %v587, %v747
      %v780 = vadd.f32 %v588, %v748
      %v781 = vadd.f32 %v589, %v749
      %v782 = vadd.f32 %v590, %v750
      %v783 = vadd.f32 %v591, %v751
      %v784 = vadd.f32 %v592, %v752
      %v785 = vadd.f32 %v593, %v753
      %v786 = vadd.f32 %v594, %v754
      %v787 = vadd.f32 %v595, %v755
      %v788 = vadd.f32 %v596, %v756
      %v789 = vadd.f32 %v597, %v757
      %v790 = vadd.f32 %v598, %v758
      %v791 = vadd.f32 %v599, %v759
      %v792 = vadd.f32 %v600, %v760
      %v793 = vadd.f32 %v601, %v761
      %v794 = vadd.f32 %v602, %v762
      %v795 = vadd.f32 %v603, %v763
      %v796 = vadd.f32 %v604, %v764
      %v797 = vadd.f32 %v605, %v765
      %v798 = vadd.f32 %v606, %v766
      %v799 = vadd.f32 %v607, %v767
      %v800 = vadd.f32 %v608, %v768
      %v801 = vadd.f32 %v609, %v769
      %v802 = vadd.f32 %v610, %v770
      %v803 = vadd.f32 %v611, %v771
      %v804 = vadd.f32 %v612, %v772
      %v805 = vadd.f32 %v613, %v773
      %v806 = vadd.f32 %v614, %v774
      %v807 = vadd.s32 %v228, 96
      %v808 = vadd.s32 %v229, 96
      %v809 = vadd.s32 %v230, 96
      %v810 = vadd.s32 %v231, 96
      %v811 = vadd.s32 %v232, 96
      %v812 = vadd.s32 %v233, 96
      %v813 = vadd.s32 %v234, 96
      %v814 = vadd.s32 %v235, 96
      %v815 = vadd.s32 %v236, 96
      %v816 = vadd.s32 %v237, 96
      %v817 = vadd.s32 %v238, 96
      %v818 = vadd.s32 %v239, 96
      %v819 = vadd.s32 %v240, 96
      %v820 = vadd.s32 %v241, 96
      %v821 = vadd.s32 %v242, 96
      %v822 = vadd.s32 %v243, 96
      %823 = vset.pattern.permute.xlu0 3
      %824 = vperm.xlu0 %823, %v807
      %v825 = vpop.permute.xlu0 %824
      %826 = vset.pattern.permute.xlu0 3
      %827 = vperm.xlu0 %826, %v808
      %v828 = vpop.permute.xlu0 %827
      %829 = vset.pattern.permute.xlu0 3
      %830 = vperm.xlu0 %829, %v809
      %v831 = vpop.permute.xlu0 %830
      %832 = vset.pattern.permute.xlu0 3
      %833 = vperm.xlu0 %832, %v810
      %v834 = vpop.permute.xlu0 %833
      %835 = vset.pattern.permute.xlu0 3
      %836 = vperm.xlu0 %835, %v811
      %v837 = vpop.permute.xlu0 %836
      %838 = vset.pattern.permute.xlu0 3
      %839 = vperm.xlu0 %838, %v812
      %v840 = vpop.permute.xlu0 %839
      %841 = vset.pattern.permute.xlu0 3
      %842 = vperm.xlu0 %841, %v813
      %v843 = vpop.permute.xlu0 %842
      %844 = vset.pattern.permute.xlu0 3
      %845 = vperm.xlu0 %844, %v814
      %v846 = vpop.permute.xlu0 %845
      %847 = vset.pattern.permute.xlu0 3
      %848 = vperm.xlu0 %847, %v815
      %v849 = vpop.permute.xlu0 %848
      %850 = vset.pattern.permute.xlu0 3
      %851 = vperm.xlu0 %850, %v816
      %v852 = vpop.permute.xlu0 %851
      %853 = vset.pattern.permute.xlu0 3
      %854 = vperm.xlu0 %853, %v817
      %v855 = vpop.permute.xlu0 %854
      %856 = vset.pattern.permute.xlu0 3
      %857 = vperm.xlu0 %856, %v818
      %v858 = vpop.permute.xlu0 %857
      %859 = vset.pattern.permute.xlu0 3
      %860 = vperm.xlu0 %859, %v819
      %v861 = vpop.permute.xlu0 %860
      %862 = vset.pattern.permute.xlu0 3
      %863 = vperm.xlu0 %862, %v820
      %v864 = vpop.permute.xlu0 %863
      %865 = vset.pattern.permute.xlu0 3
      %866 = vperm.xlu0 %865, %v821
      %v867 = vpop.permute.xlu0 %866
      %868 = vset.pattern.permute.xlu0 3
      %869 = vperm.xlu0 %868, %v822
      %v870 = vpop.permute.xlu0 %869
      %vm871 = vcmp.eq.s32.totalorder %v245, %v825
      %vm872 = vcmp.eq.s32.totalorder %v246, %v825
      %vm873 = vcmp.eq.s32.totalorder %v245, %v828
      %vm874 = vcmp.eq.s32.totalorder %v246, %v828
      %vm875 = vcmp.eq.s32.totalorder %v245, %v831
      %vm876 = vcmp.eq.s32.totalorder %v246, %v831
      %vm877 = vcmp.eq.s32.totalorder %v245, %v834
      %vm878 = vcmp.eq.s32.totalorder %v246, %v834
      %vm879 = vcmp.eq.s32.totalorder %v245, %v837
      %vm880 = vcmp.eq.s32.totalorder %v246, %v837
      %vm881 = vcmp.eq.s32.totalorder %v245, %v840
      %vm882 = vcmp.eq.s32.totalorder %v246, %v840
      %vm883 = vcmp.eq.s32.totalorder %v245, %v843
      %vm884 = vcmp.eq.s32.totalorder %v246, %v843
      %vm885 = vcmp.eq.s32.totalorder %v245, %v846
      %vm886 = vcmp.eq.s32.totalorder %v246, %v846
      %vm887 = vcmp.eq.s32.totalorder %v245, %v849
      %vm888 = vcmp.eq.s32.totalorder %v246, %v849
      %vm889 = vcmp.eq.s32.totalorder %v245, %v852
      %vm890 = vcmp.eq.s32.totalorder %v246, %v852
      %vm891 = vcmp.eq.s32.totalorder %v245, %v855
      %vm892 = vcmp.eq.s32.totalorder %v246, %v855
      %vm893 = vcmp.eq.s32.totalorder %v245, %v858
      %vm894 = vcmp.eq.s32.totalorder %v246, %v858
      %vm895 = vcmp.eq.s32.totalorder %v245, %v861
      %vm896 = vcmp.eq.s32.totalorder %v246, %v861
      %vm897 = vcmp.eq.s32.totalorder %v245, %v864
      %vm898 = vcmp.eq.s32.totalorder %v246, %v864
      %vm899 = vcmp.eq.s32.totalorder %v245, %v867
      %vm900 = vcmp.eq.s32.totalorder %v246, %v867
      %vm901 = vcmp.eq.s32.totalorder %v245, %v870
      %vm902 = vcmp.eq.s32.totalorder %v246, %v870
      %v903 = vsel %vm871, 1, 0
      %v904 = vsel %vm872, 1, 0
      %v905 = vsel %vm873, 1, 0
      %v906 = vsel %vm874, 1, 0
      %v907 = vsel %vm875, 1, 0
      %v908 = vsel %vm876, 1, 0
      %v909 = vsel %vm877, 1, 0
      %v910 = vsel %vm878, 1, 0
      %v911 = vsel %vm879, 1, 0
      %v912 = vsel %vm880, 1, 0
      %v913 = vsel %vm881, 1, 0
      %v914 = vsel %vm882, 1, 0
      %v915 = vsel %vm883, 1, 0
      %v916 = vsel %vm884, 1, 0
      %v917 = vsel %vm885, 1, 0
      %v918 = vsel %vm886, 1, 0
      %v919 = vsel %vm887, 1, 0
      %v920 = vsel %vm888, 1, 0
      %v921 = vsel %vm889, 1, 0
      %v922 = vsel %vm890, 1, 0
      %v923 = vsel %vm891, 1, 0
      %v924 = vsel %vm892, 1, 0
      %v925 = vsel %vm893, 1, 0
      %v926 = vsel %vm894, 1, 0
      %v927 = vsel %vm895, 1, 0
      %v928 = vsel %vm896, 1, 0
      %v929 = vsel %vm897, 1, 0
      %v930 = vsel %vm898, 1, 0
      %v931 = vsel %vm899, 1, 0
      %v932 = vsel %vm900, 1, 0
      %v933 = vsel %vm901, 1, 0
      %v934 = vsel %vm902, 1, 0
      %v935 = vcvt.s32.f32 %v903
      %v936 = vcvt.s32.f32 %v904
      %v937 = vcvt.s32.f32 %v905
      %v938 = vcvt.s32.f32 %v906
      %v939 = vcvt.s32.f32 %v907
      %v940 = vcvt.s32.f32 %v908
      %v941 = vcvt.s32.f32 %v909
      %v942 = vcvt.s32.f32 %v910
      %v943 = vcvt.s32.f32 %v911
      %v944 = vcvt.s32.f32 %v912
      %v945 = vcvt.s32.f32 %v913
      %v946 = vcvt.s32.f32 %v914
      %v947 = vcvt.s32.f32 %v915
      %v948 = vcvt.s32.f32 %v916
      %v949 = vcvt.s32.f32 %v917
      %v950 = vcvt.s32.f32 %v918
      %v951 = vcvt.s32.f32 %v919
      %v952 = vcvt.s32.f32 %v920
      %v953 = vcvt.s32.f32 %v921
      %v954 = vcvt.s32.f32 %v922
      %v955 = vcvt.s32.f32 %v923
      %v956 = vcvt.s32.f32 %v924
      %v957 = vcvt.s32.f32 %v925
      %v958 = vcvt.s32.f32 %v926
      %v959 = vcvt.s32.f32 %v927
      %v960 = vcvt.s32.f32 %v928
      %v961 = vcvt.s32.f32 %v929
      %v962 = vcvt.s32.f32 %v930
      %v963 = vcvt.s32.f32 %v931
      %v964 = vcvt.s32.f32 %v932
      %v965 = vcvt.s32.f32 %v933
      %v966 = vcvt.s32.f32 %v934
      %v967 = vadd.f32 %v775, %v935
      %v968 = vadd.f32 %v776, %v936
      %v969 = vadd.f32 %v777, %v937
      %v970 = vadd.f32 %v778, %v938
      %v971 = vadd.f32 %v779, %v939
      %v972 = vadd.f32 %v780, %v940
      %v973 = vadd.f32 %v781, %v941
      %v974 = vadd.f32 %v782, %v942
      %v975 = vadd.f32 %v783, %v943
      %v976 = vadd.f32 %v784, %v944
      %v977 = vadd.f32 %v785, %v945
      %v978 = vadd.f32 %v786, %v946
      %v979 = vadd.f32 %v787, %v947
      %v980 = vadd.f32 %v788, %v948
      %v981 = vadd.f32 %v789, %v949
      %v982 = vadd.f32 %v790, %v950
      %v983 = vadd.f32 %v791, %v951
      %v984 = vadd.f32 %v792, %v952
      %v985 = vadd.f32 %v793, %v953
      %v986 = vadd.f32 %v794, %v954
      %v987 = vadd.f32 %v795, %v955
      %v988 = vadd.f32 %v796, %v956
      %v989 = vadd.f32 %v797, %v957
      %v990 = vadd.f32 %v798, %v958
      %v991 = vadd.f32 %v799, %v959
      %v992 = vadd.f32 %v800, %v960
      %v993 = vadd.f32 %v801, %v961
      %v994 = vadd.f32 %v802, %v962
      %v995 = vadd.f32 %v803, %v963
      %v996 = vadd.f32 %v804, %v964
      %v997 = vadd.f32 %v805, %v965
      %v998 = vadd.f32 %v806, %v966
      %v999 = vadd.s32 %v228, 128
      %v1000 = vadd.s32 %v229, 128
      %v1001 = vadd.s32 %v230, 128
      %v1002 = vadd.s32 %v231, 128
      %v1003 = vadd.s32 %v232, 128
      %v1004 = vadd.s32 %v233, 128
      %v1005 = vadd.s32 %v234, 128
      %v1006 = vadd.s32 %v235, 128
      %v1007 = vadd.s32 %v236, 128
      %v1008 = vadd.s32 %v237, 128
      %v1009 = vadd.s32 %v238, 128
      %v1010 = vadd.s32 %v239, 128
      %v1011 = vadd.s32 %v240, 128
      %v1012 = vadd.s32 %v241, 128
      %v1013 = vadd.s32 %v242, 128
      %v1014 = vadd.s32 %v243, 128
      %1015 = vset.pattern.permute.xlu0 4
      %1016 = vperm.xlu0 %1015, %v999
      %v1017 = vpop.permute.xlu0 %1016
      %1018 = vset.pattern.permute.xlu0 4
      %1019 = vperm.xlu0 %1018, %v1000
      %v1020 = vpop.permute.xlu0 %1019
      %1021 = vset.pattern.permute.xlu0 4
      %1022 = vperm.xlu0 %1021, %v1001
      %v1023 = vpop.permute.xlu0 %1022
      %1024 = vset.pattern.permute.xlu0 4
      %1025 = vperm.xlu0 %1024, %v1002
      %v1026 = vpop.permute.xlu0 %1025
      %1027 = vset.pattern.permute.xlu0 4
      %1028 = vperm.xlu0 %1027, %v1003
      %v1029 = vpop.permute.xlu0 %1028
      %1030 = vset.pattern.permute.xlu0 4
      %1031 = vperm.xlu0 %1030, %v1004
      %v1032 = vpop.permute.xlu0 %1031
      %1033 = vset.pattern.permute.xlu0 4
      %1034 = vperm.xlu0 %1033, %v1005
      %v1035 = vpop.permute.xlu0 %1034
      %1036 = vset.pattern.permute.xlu0 4
      %1037 = vperm.xlu0 %1036, %v1006
      %v1038 = vpop.permute.xlu0 %1037
      %1039 = vset.pattern.permute.xlu0 4
      %1040 = vperm.xlu0 %1039, %v1007
      %v1041 = vpop.permute.xlu0 %1040
      %1042 = vset.pattern.permute.xlu0 4
      %1043 = vperm.xlu0 %1042, %v1008
      %v1044 = vpop.permute.xlu0 %1043
      %1045 = vset.pattern.permute.xlu0 4
      %1046 = vperm.xlu0 %1045, %v1009
      %v1047 = vpop.permute.xlu0 %1046
      %1048 = vset.pattern.permute.xlu0 4
      %1049 = vperm.xlu0 %1048, %v1010
      %v1050 = vpop.permute.xlu0 %1049
      %1051 = vset.pattern.permute.xlu0 4
      %1052 = vperm.xlu0 %1051, %v1011
      %v1053 = vpop.permute.xlu0 %1052
      %1054 = vset.pattern.permute.xlu0 4
      %1055 = vperm.xlu0 %1054, %v1012
      %v1056 = vpop.permute.xlu0 %1055
      %1057 = vset.pattern.permute.xlu0 4
      %1058 = vperm.xlu0 %1057, %v1013
      %v1059 = vpop.permute.xlu0 %1058
      %1060 = vset.pattern.permute.xlu0 4
      %1061 = vperm.xlu0 %1060, %v1014
      %v1062 = vpop.permute.xlu0 %1061
      %vm1063 = vcmp.eq.s32.totalorder %v245, %v1017
      %vm1064 = vcmp.eq.s32.totalorder %v246, %v1017
      %vm1065 = vcmp.eq.s32.totalorder %v245, %v1020
      %vm1066 = vcmp.eq.s32.totalorder %v246, %v1020
      %vm1067 = vcmp.eq.s32.totalorder %v245, %v1023
      %vm1068 = vcmp.eq.s32.totalorder %v246, %v1023
      %vm1069 = vcmp.eq.s32.totalorder %v245, %v1026
      %vm1070 = vcmp.eq.s32.totalorder %v246, %v1026
      %vm1071 = vcmp.eq.s32.totalorder %v245, %v1029
      %vm1072 = vcmp.eq.s32.totalorder %v246, %v1029
      %vm1073 = vcmp.eq.s32.totalorder %v245, %v1032
      %vm1074 = vcmp.eq.s32.totalorder %v246, %v1032
      %vm1075 = vcmp.eq.s32.totalorder %v245, %v1035
      %vm1076 = vcmp.eq.s32.totalorder %v246, %v1035
      %vm1077 = vcmp.eq.s32.totalorder %v245, %v1038
      %vm1078 = vcmp.eq.s32.totalorder %v246, %v1038
      %vm1079 = vcmp.eq.s32.totalorder %v245, %v1041
      %vm1080 = vcmp.eq.s32.totalorder %v246, %v1041
      %vm1081 = vcmp.eq.s32.totalorder %v245, %v1044
      %vm1082 = vcmp.eq.s32.totalorder %v246, %v1044
      %vm1083 = vcmp.eq.s32.totalorder %v245, %v1047
      %vm1084 = vcmp.eq.s32.totalorder %v246, %v1047
      %vm1085 = vcmp.eq.s32.totalorder %v245, %v1050
      %vm1086 = vcmp.eq.s32.totalorder %v246, %v1050
      %vm1087 = vcmp.eq.s32.totalorder %v245, %v1053
      %vm1088 = vcmp.eq.s32.totalorder %v246, %v1053
      %vm1089 = vcmp.eq.s32.totalorder %v245, %v1056
      %vm1090 = vcmp.eq.s32.totalorder %v246, %v1056
      %vm1091 = vcmp.eq.s32.totalorder %v245, %v1059
      %vm1092 = vcmp.eq.s32.totalorder %v246, %v1059
      %vm1093 = vcmp.eq.s32.totalorder %v245, %v1062
      %vm1094 = vcmp.eq.s32.totalorder %v246, %v1062
      %v1095 = vsel %vm1063, 1, 0
      %v1096 = vsel %vm1064, 1, 0
      %v1097 = vsel %vm1065, 1, 0
      %v1098 = vsel %vm1066, 1, 0
      %v1099 = vsel %vm1067, 1, 0
      %v1100 = vsel %vm1068, 1, 0
      %v1101 = vsel %vm1069, 1, 0
      %v1102 = vsel %vm1070, 1, 0
      %v1103 = vsel %vm1071, 1, 0
      %v1104 = vsel %vm1072, 1, 0
      %v1105 = vsel %vm1073, 1, 0
      %v1106 = vsel %vm1074, 1, 0
      %v1107 = vsel %vm1075, 1, 0
      %v1108 = vsel %vm1076, 1, 0
      %v1109 = vsel %vm1077, 1, 0
      %v1110 = vsel %vm1078, 1, 0
      %v1111 = vsel %vm1079, 1, 0
      %v1112 = vsel %vm1080, 1, 0
      %v1113 = vsel %vm1081, 1, 0
      %v1114 = vsel %vm1082, 1, 0
      %v1115 = vsel %vm1083, 1, 0
      %v1116 = vsel %vm1084, 1, 0
      %v1117 = vsel %vm1085, 1, 0
      %v1118 = vsel %vm1086, 1, 0
      %v1119 = vsel %vm1087, 1, 0
      %v1120 = vsel %vm1088, 1, 0
      %v1121 = vsel %vm1089, 1, 0
      %v1122 = vsel %vm1090, 1, 0
      %v1123 = vsel %vm1091, 1, 0
      %v1124 = vsel %vm1092, 1, 0
      %v1125 = vsel %vm1093, 1, 0
      %v1126 = vsel %vm1094, 1, 0
      %v1127 = vcvt.s32.f32 %v1095
      %v1128 = vcvt.s32.f32 %v1096
      %v1129 = vcvt.s32.f32 %v1097
      %v1130 = vcvt.s32.f32 %v1098
      %v1131 = vcvt.s32.f32 %v1099
      %v1132 = vcvt.s32.f32 %v1100
      %v1133 = vcvt.s32.f32 %v1101
      %v1134 = vcvt.s32.f32 %v1102
      %v1135 = vcvt.s32.f32 %v1103
      %v1136 = vcvt.s32.f32 %v1104
      %v1137 = vcvt.s32.f32 %v1105
      %v1138 = vcvt.s32.f32 %v1106
      %v1139 = vcvt.s32.f32 %v1107
      %v1140 = vcvt.s32.f32 %v1108
      %v1141 = vcvt.s32.f32 %v1109
      %v1142 = vcvt.s32.f32 %v1110
      %v1143 = vcvt.s32.f32 %v1111
      %v1144 = vcvt.s32.f32 %v1112
      %v1145 = vcvt.s32.f32 %v1113
      %v1146 = vcvt.s32.f32 %v1114
      %v1147 = vcvt.s32.f32 %v1115
      %v1148 = vcvt.s32.f32 %v1116
      %v1149 = vcvt.s32.f32 %v1117
      %v1150 = vcvt.s32.f32 %v1118
      %v1151 = vcvt.s32.f32 %v1119
      %v1152 = vcvt.s32.f32 %v1120
      %v1153 = vcvt.s32.f32 %v1121
      %v1154 = vcvt.s32.f32 %v1122
      %v1155 = vcvt.s32.f32 %v1123
      %v1156 = vcvt.s32.f32 %v1124
      %v1157 = vcvt.s32.f32 %v1125
      %v1158 = vcvt.s32.f32 %v1126
      %v1159 = vadd.f32 %v967, %v1127
      %v1160 = vadd.f32 %v968, %v1128
      %v1161 = vadd.f32 %v969, %v1129
      %v1162 = vadd.f32 %v970, %v1130
      %v1163 = vadd.f32 %v971, %v1131
      %v1164 = vadd.f32 %v972, %v1132
      %v1165 = vadd.f32 %v973, %v1133
      %v1166 = vadd.f32 %v974, %v1134
      %v1167 = vadd.f32 %v975, %v1135
      %v1168 = vadd.f32 %v976, %v1136
      %v1169 = vadd.f32 %v977, %v1137
      %v1170 = vadd.f32 %v978, %v1138
      %v1171 = vadd.f32 %v979, %v1139
      %v1172 = vadd.f32 %v980, %v1140
      %v1173 = vadd.f32 %v981, %v1141
      %v1174 = vadd.f32 %v982, %v1142
      %v1175 = vadd.f32 %v983, %v1143
      %v1176 = vadd.f32 %v984, %v1144
      %v1177 = vadd.f32 %v985, %v1145
      %v1178 = vadd.f32 %v986, %v1146
      %v1179 = vadd.f32 %v987, %v1147
      %v1180 = vadd.f32 %v988, %v1148
      %v1181 = vadd.f32 %v989, %v1149
      %v1182 = vadd.f32 %v990, %v1150
      %v1183 = vadd.f32 %v991, %v1151
      %v1184 = vadd.f32 %v992, %v1152
      %v1185 = vadd.f32 %v993, %v1153
      %v1186 = vadd.f32 %v994, %v1154
      %v1187 = vadd.f32 %v995, %v1155
      %v1188 = vadd.f32 %v996, %v1156
      %v1189 = vadd.f32 %v997, %v1157
      %v1190 = vadd.f32 %v998, %v1158
      %v1191 = vadd.s32 %v228, 160
      %v1192 = vadd.s32 %v229, 160
      %v1193 = vadd.s32 %v230, 160
      %v1194 = vadd.s32 %v231, 160
      %v1195 = vadd.s32 %v232, 160
      %v1196 = vadd.s32 %v233, 160
      %v1197 = vadd.s32 %v234, 160
      %v1198 = vadd.s32 %v235, 160
      %v1199 = vadd.s32 %v236, 160
      %v1200 = vadd.s32 %v237, 160
      %v1201 = vadd.s32 %v238, 160
      %v1202 = vadd.s32 %v239, 160
      %v1203 = vadd.s32 %v240, 160
      %v1204 = vadd.s32 %v241, 160
      %v1205 = vadd.s32 %v242, 160
      %v1206 = vadd.s32 %v243, 160
      %1207 = vset.pattern.permute.xlu0 5
      %1208 = vperm.xlu0 %1207, %v1191
      %v1209 = vpop.permute.xlu0 %1208
      %1210 = vset.pattern.permute.xlu0 5
      %1211 = vperm.xlu0 %1210, %v1192
      %v1212 = vpop.permute.xlu0 %1211
      %1213 = vset.pattern.permute.xlu0 5
      %1214 = vperm.xlu0 %1213, %v1193
      %v1215 = vpop.permute.xlu0 %1214
      %1216 = vset.pattern.permute.xlu0 5
      %1217 = vperm.xlu0 %1216, %v1194
      %v1218 = vpop.permute.xlu0 %1217
      %1219 = vset.pattern.permute.xlu0 5
      %1220 = vperm.xlu0 %1219, %v1195
      %v1221 = vpop.permute.xlu0 %1220
      %1222 = vset.pattern.permute.xlu0 5
      %1223 = vperm.xlu0 %1222, %v1196
      %v1224 = vpop.permute.xlu0 %1223
      %1225 = vset.pattern.permute.xlu0 5
      %1226 = vperm.xlu0 %1225, %v1197
      %v1227 = vpop.permute.xlu0 %1226
      %1228 = vset.pattern.permute.xlu0 5
      %1229 = vperm.xlu0 %1228, %v1198
      %v1230 = vpop.permute.xlu0 %1229
      %1231 = vset.pattern.permute.xlu0 5
      %1232 = vperm.xlu0 %1231, %v1199
      %v1233 = vpop.permute.xlu0 %1232
      %1234 = vset.pattern.permute.xlu0 5
      %1235 = vperm.xlu0 %1234, %v1200
      %v1236 = vpop.permute.xlu0 %1235
      %1237 = vset.pattern.permute.xlu0 5
      %1238 = vperm.xlu0 %1237, %v1201
      %v1239 = vpop.permute.xlu0 %1238
      %1240 = vset.pattern.permute.xlu0 5
      %1241 = vperm.xlu0 %1240, %v1202
      %v1242 = vpop.permute.xlu0 %1241
      %1243 = vset.pattern.permute.xlu0 5
      %1244 = vperm.xlu0 %1243, %v1203
      %v1245 = vpop.permute.xlu0 %1244
      %1246 = vset.pattern.permute.xlu0 5
      %1247 = vperm.xlu0 %1246, %v1204
      %v1248 = vpop.permute.xlu0 %1247
      %1249 = vset.pattern.permute.xlu0 5
      %1250 = vperm.xlu0 %1249, %v1205
      %v1251 = vpop.permute.xlu0 %1250
      %1252 = vset.pattern.permute.xlu0 5
      %1253 = vperm.xlu0 %1252, %v1206
      %v1254 = vpop.permute.xlu0 %1253
      %vm1255 = vcmp.eq.s32.totalorder %v245, %v1209
      %vm1256 = vcmp.eq.s32.totalorder %v246, %v1209
      %vm1257 = vcmp.eq.s32.totalorder %v245, %v1212
      %vm1258 = vcmp.eq.s32.totalorder %v246, %v1212
      %vm1259 = vcmp.eq.s32.totalorder %v245, %v1215
      %vm1260 = vcmp.eq.s32.totalorder %v246, %v1215
      %vm1261 = vcmp.eq.s32.totalorder %v245, %v1218
      %vm1262 = vcmp.eq.s32.totalorder %v246, %v1218
      %vm1263 = vcmp.eq.s32.totalorder %v245, %v1221
      %vm1264 = vcmp.eq.s32.totalorder %v246, %v1221
      %vm1265 = vcmp.eq.s32.totalorder %v245, %v1224
      %vm1266 = vcmp.eq.s32.totalorder %v246, %v1224
      %vm1267 = vcmp.eq.s32.totalorder %v245, %v1227
      %vm1268 = vcmp.eq.s32.totalorder %v246, %v1227
      %vm1269 = vcmp.eq.s32.totalorder %v245, %v1230
      %vm1270 = vcmp.eq.s32.totalorder %v246, %v1230
      %vm1271 = vcmp.eq.s32.totalorder %v245, %v1233
      %vm1272 = vcmp.eq.s32.totalorder %v246, %v1233
      %vm1273 = vcmp.eq.s32.totalorder %v245, %v1236
      %vm1274 = vcmp.eq.s32.totalorder %v246, %v1236
      %vm1275 = vcmp.eq.s32.totalorder %v245, %v1239
      %vm1276 = vcmp.eq.s32.totalorder %v246, %v1239
      %vm1277 = vcmp.eq.s32.totalorder %v245, %v1242
      %vm1278 = vcmp.eq.s32.totalorder %v246, %v1242
      %vm1279 = vcmp.eq.s32.totalorder %v245, %v1245
      %vm1280 = vcmp.eq.s32.totalorder %v246, %v1245
      %vm1281 = vcmp.eq.s32.totalorder %v245, %v1248
      %vm1282 = vcmp.eq.s32.totalorder %v246, %v1248
      %vm1283 = vcmp.eq.s32.totalorder %v245, %v1251
      %vm1284 = vcmp.eq.s32.totalorder %v246, %v1251
      %vm1285 = vcmp.eq.s32.totalorder %v245, %v1254
      %vm1286 = vcmp.eq.s32.totalorder %v246, %v1254
      %v1287 = vsel %vm1255, 1, 0
      %v1288 = vsel %vm1256, 1, 0
      %v1289 = vsel %vm1257, 1, 0
      %v1290 = vsel %vm1258, 1, 0
      %v1291 = vsel %vm1259, 1, 0
      %v1292 = vsel %vm1260, 1, 0
      %v1293 = vsel %vm1261, 1, 0
      %v1294 = vsel %vm1262, 1, 0
      %v1295 = vsel %vm1263, 1, 0
      %v1296 = vsel %vm1264, 1, 0
      %v1297 = vsel %vm1265, 1, 0
      %v1298 = vsel %vm1266, 1, 0
      %v1299 = vsel %vm1267, 1, 0
      %v1300 = vsel %vm1268, 1, 0
      %v1301 = vsel %vm1269, 1, 0
      %v1302 = vsel %vm1270, 1, 0
      %v1303 = vsel %vm1271, 1, 0
      %v1304 = vsel %vm1272, 1, 0
      %v1305 = vsel %vm1273, 1, 0
      %v1306 = vsel %vm1274, 1, 0
      %v1307 = vsel %vm1275, 1, 0
      %v1308 = vsel %vm1276, 1, 0
      %v1309 = vsel %vm1277, 1, 0
      %v1310 = vsel %vm1278, 1, 0
      %v1311 = vsel %vm1279, 1, 0
      %v1312 = vsel %vm1280, 1, 0
      %v1313 = vsel %vm1281, 1, 0
      %v1314 = vsel %vm1282, 1, 0
      %v1315 = vsel %vm1283, 1, 0
      %v1316 = vsel %vm1284, 1, 0
      %v1317 = vsel %vm1285, 1, 0
      %v1318 = vsel %vm1286, 1, 0
      %v1319 = vcvt.s32.f32 %v1287
      %v1320 = vcvt.s32.f32 %v1288
      %v1321 = vcvt.s32.f32 %v1289
      %v1322 = vcvt.s32.f32 %v1290
      %v1323 = vcvt.s32.f32 %v1291
      %v1324 = vcvt.s32.f32 %v1292
      %v1325 = vcvt.s32.f32 %v1293
      %v1326 = vcvt.s32.f32 %v1294
      %v1327 = vcvt.s32.f32 %v1295
      %v1328 = vcvt.s32.f32 %v1296
      %v1329 = vcvt.s32.f32 %v1297
      %v1330 = vcvt.s32.f32 %v1298
      %v1331 = vcvt.s32.f32 %v1299
      %v1332 = vcvt.s32.f32 %v1300
      %v1333 = vcvt.s32.f32 %v1301
      %v1334 = vcvt.s32.f32 %v1302
      %v1335 = vcvt.s32.f32 %v1303
      %v1336 = vcvt.s32.f32 %v1304
      %v1337 = vcvt.s32.f32 %v1305
      %v1338 = vcvt.s32.f32 %v1306
      %v1339 = vcvt.s32.f32 %v1307
      %v1340 = vcvt.s32.f32 %v1308
      %v1341 = vcvt.s32.f32 %v1309
      %v1342 = vcvt.s32.f32 %v1310
      %v1343 = vcvt.s32.f32 %v1311
      %v1344 = vcvt.s32.f32 %v1312
      %v1345 = vcvt.s32.f32 %v1313
      %v1346 = vcvt.s32.f32 %v1314
      %v1347 = vcvt.s32.f32 %v1315
      %v1348 = vcvt.s32.f32 %v1316
      %v1349 = vcvt.s32.f32 %v1317
      %v1350 = vcvt.s32.f32 %v1318
      %v1351 = vadd.f32 %v1159, %v1319
      %v1352 = vadd.f32 %v1160, %v1320
      %v1353 = vadd.f32 %v1161, %v1321
      %v1354 = vadd.f32 %v1162, %v1322
      %v1355 = vadd.f32 %v1163, %v1323
      %v1356 = vadd.f32 %v1164, %v1324
      %v1357 = vadd.f32 %v1165, %v1325
      %v1358 = vadd.f32 %v1166, %v1326
      %v1359 = vadd.f32 %v1167, %v1327
      %v1360 = vadd.f32 %v1168, %v1328
      %v1361 = vadd.f32 %v1169, %v1329
      %v1362 = vadd.f32 %v1170, %v1330
      %v1363 = vadd.f32 %v1171, %v1331
      %v1364 = vadd.f32 %v1172, %v1332
      %v1365 = vadd.f32 %v1173, %v1333
      %v1366 = vadd.f32 %v1174, %v1334
      %v1367 = vadd.f32 %v1175, %v1335
      %v1368 = vadd.f32 %v1176, %v1336
      %v1369 = vadd.f32 %v1177, %v1337
      %v1370 = vadd.f32 %v1178, %v1338
      %v1371 = vadd.f32 %v1179, %v1339
      %v1372 = vadd.f32 %v1180, %v1340
      %v1373 = vadd.f32 %v1181, %v1341
      %v1374 = vadd.f32 %v1182, %v1342
      %v1375 = vadd.f32 %v1183, %v1343
      %v1376 = vadd.f32 %v1184, %v1344
      %v1377 = vadd.f32 %v1185, %v1345
      %v1378 = vadd.f32 %v1186, %v1346
      %v1379 = vadd.f32 %v1187, %v1347
      %v1380 = vadd.f32 %v1188, %v1348
      %v1381 = vadd.f32 %v1189, %v1349
      %v1382 = vadd.f32 %v1190, %v1350
      %v1383 = vadd.s32 %v228, 192
      %v1384 = vadd.s32 %v229, 192
      %v1385 = vadd.s32 %v230, 192
      %v1386 = vadd.s32 %v231, 192
      %v1387 = vadd.s32 %v232, 192
      %v1388 = vadd.s32 %v233, 192
      %v1389 = vadd.s32 %v234, 192
      %v1390 = vadd.s32 %v235, 192
      %v1391 = vadd.s32 %v236, 192
      %v1392 = vadd.s32 %v237, 192
      %v1393 = vadd.s32 %v238, 192
      %v1394 = vadd.s32 %v239, 192
      %v1395 = vadd.s32 %v240, 192
      %v1396 = vadd.s32 %v241, 192
      %v1397 = vadd.s32 %v242, 192
      %v1398 = vadd.s32 %v243, 192
      %1399 = vset.pattern.permute.xlu0 6
      %1400 = vperm.xlu0 %1399, %v1383
      %v1401 = vpop.permute.xlu0 %1400
      %1402 = vset.pattern.permute.xlu0 6
      %1403 = vperm.xlu0 %1402, %v1384
      %v1404 = vpop.permute.xlu0 %1403
      %1405 = vset.pattern.permute.xlu0 6
      %1406 = vperm.xlu0 %1405, %v1385
      %v1407 = vpop.permute.xlu0 %1406
      %1408 = vset.pattern.permute.xlu0 6
      %1409 = vperm.xlu0 %1408, %v1386
      %v1410 = vpop.permute.xlu0 %1409
      %1411 = vset.pattern.permute.xlu0 6
      %1412 = vperm.xlu0 %1411, %v1387
      %v1413 = vpop.permute.xlu0 %1412
      %1414 = vset.pattern.permute.xlu0 6
      %1415 = vperm.xlu0 %1414, %v1388
      %v1416 = vpop.permute.xlu0 %1415
      %1417 = vset.pattern.permute.xlu0 6
      %1418 = vperm.xlu0 %1417, %v1389
      %v1419 = vpop.permute.xlu0 %1418
      %1420 = vset.pattern.permute.xlu0 6
      %1421 = vperm.xlu0 %1420, %v1390
      %v1422 = vpop.permute.xlu0 %1421
      %1423 = vset.pattern.permute.xlu0 6
      %1424 = vperm.xlu0 %1423, %v1391
      %v1425 = vpop.permute.xlu0 %1424
      %1426 = vset.pattern.permute.xlu0 6
      %1427 = vperm.xlu0 %1426, %v1392
      %v1428 = vpop.permute.xlu0 %1427
      %1429 = vset.pattern.permute.xlu0 6
      %1430 = vperm.xlu0 %1429, %v1393
      %v1431 = vpop.permute.xlu0 %1430
      %1432 = vset.pattern.permute.xlu0 6
      %1433 = vperm.xlu0 %1432, %v1394
      %v1434 = vpop.permute.xlu0 %1433
      %1435 = vset.pattern.permute.xlu0 6
      %1436 = vperm.xlu0 %1435, %v1395
      %v1437 = vpop.permute.xlu0 %1436
      %1438 = vset.pattern.permute.xlu0 6
      %1439 = vperm.xlu0 %1438, %v1396
      %v1440 = vpop.permute.xlu0 %1439
      %1441 = vset.pattern.permute.xlu0 6
      %1442 = vperm.xlu0 %1441, %v1397
      %v1443 = vpop.permute.xlu0 %1442
      %1444 = vset.pattern.permute.xlu0 6
      %1445 = vperm.xlu0 %1444, %v1398
      %v1446 = vpop.permute.xlu0 %1445
      %vm1447 = vcmp.eq.s32.totalorder %v245, %v1401
      %vm1448 = vcmp.eq.s32.totalorder %v246, %v1401
      %vm1449 = vcmp.eq.s32.totalorder %v245, %v1404
      %vm1450 = vcmp.eq.s32.totalorder %v246, %v1404
      %vm1451 = vcmp.eq.s32.totalorder %v245, %v1407
      %vm1452 = vcmp.eq.s32.totalorder %v246, %v1407
      %vm1453 = vcmp.eq.s32.totalorder %v245, %v1410
      %vm1454 = vcmp.eq.s32.totalorder %v246, %v1410
      %vm1455 = vcmp.eq.s32.totalorder %v245, %v1413
      %vm1456 = vcmp.eq.s32.totalorder %v246, %v1413
      %vm1457 = vcmp.eq.s32.totalorder %v245, %v1416
      %vm1458 = vcmp.eq.s32.totalorder %v246, %v1416
      %vm1459 = vcmp.eq.s32.totalorder %v245, %v1419
      %vm1460 = vcmp.eq.s32.totalorder %v246, %v1419
      %vm1461 = vcmp.eq.s32.totalorder %v245, %v1422
      %vm1462 = vcmp.eq.s32.totalorder %v246, %v1422
      %vm1463 = vcmp.eq.s32.totalorder %v245, %v1425
      %vm1464 = vcmp.eq.s32.totalorder %v246, %v1425
      %vm1465 = vcmp.eq.s32.totalorder %v245, %v1428
      %vm1466 = vcmp.eq.s32.totalorder %v246, %v1428
      %vm1467 = vcmp.eq.s32.totalorder %v245, %v1431
      %vm1468 = vcmp.eq.s32.totalorder %v246, %v1431
      %vm1469 = vcmp.eq.s32.totalorder %v245, %v1434
      %vm1470 = vcmp.eq.s32.totalorder %v246, %v1434
      %vm1471 = vcmp.eq.s32.totalorder %v245, %v1437
      %vm1472 = vcmp.eq.s32.totalorder %v246, %v1437
      %vm1473 = vcmp.eq.s32.totalorder %v245, %v1440
      %vm1474 = vcmp.eq.s32.totalorder %v246, %v1440
      %vm1475 = vcmp.eq.s32.totalorder %v245, %v1443
      %vm1476 = vcmp.eq.s32.totalorder %v246, %v1443
      %vm1477 = vcmp.eq.s32.totalorder %v245, %v1446
      %vm1478 = vcmp.eq.s32.totalorder %v246, %v1446
      %v1479 = vsel %vm1447, 1, 0
      %v1480 = vsel %vm1448, 1, 0
      %v1481 = vsel %vm1449, 1, 0
      %v1482 = vsel %vm1450, 1, 0
      %v1483 = vsel %vm1451, 1, 0
      %v1484 = vsel %vm1452, 1, 0
      %v1485 = vsel %vm1453, 1, 0
      %v1486 = vsel %vm1454, 1, 0
      %v1487 = vsel %vm1455, 1, 0
      %v1488 = vsel %vm1456, 1, 0
      %v1489 = vsel %vm1457, 1, 0
      %v1490 = vsel %vm1458, 1, 0
      %v1491 = vsel %vm1459, 1, 0
      %v1492 = vsel %vm1460, 1, 0
      %v1493 = vsel %vm1461, 1, 0
      %v1494 = vsel %vm1462, 1, 0
      %v1495 = vsel %vm1463, 1, 0
      %v1496 = vsel %vm1464, 1, 0
      %v1497 = vsel %vm1465, 1, 0
      %v1498 = vsel %vm1466, 1, 0
      %v1499 = vsel %vm1467, 1, 0
      %v1500 = vsel %vm1468, 1, 0
      %v1501 = vsel %vm1469, 1, 0
      %v1502 = vsel %vm1470, 1, 0
      %v1503 = vsel %vm1471, 1, 0
      %v1504 = vsel %vm1472, 1, 0
      %v1505 = vsel %vm1473, 1, 0
      %v1506 = vsel %vm1474, 1, 0
      %v1507 = vsel %vm1475, 1, 0
      %v1508 = vsel %vm1476, 1, 0
      %v1509 = vsel %vm1477, 1, 0
      %v1510 = vsel %vm1478, 1, 0
      %v1511 = vcvt.s32.f32 %v1479
      %v1512 = vcvt.s32.f32 %v1480
      %v1513 = vcvt.s32.f32 %v1481
      %v1514 = vcvt.s32.f32 %v1482
      %v1515 = vcvt.s32.f32 %v1483
      %v1516 = vcvt.s32.f32 %v1484
      %v1517 = vcvt.s32.f32 %v1485
      %v1518 = vcvt.s32.f32 %v1486
      %v1519 = vcvt.s32.f32 %v1487
      %v1520 = vcvt.s32.f32 %v1488
      %v1521 = vcvt.s32.f32 %v1489
      %v1522 = vcvt.s32.f32 %v1490
      %v1523 = vcvt.s32.f32 %v1491
      %v1524 = vcvt.s32.f32 %v1492
      %v1525 = vcvt.s32.f32 %v1493
      %v1526 = vcvt.s32.f32 %v1494
      %v1527 = vcvt.s32.f32 %v1495
      %v1528 = vcvt.s32.f32 %v1496
      %v1529 = vcvt.s32.f32 %v1497
      %v1530 = vcvt.s32.f32 %v1498
      %v1531 = vcvt.s32.f32 %v1499
      %v1532 = vcvt.s32.f32 %v1500
      %v1533 = vcvt.s32.f32 %v1501
      %v1534 = vcvt.s32.f32 %v1502
      %v1535 = vcvt.s32.f32 %v1503
      %v1536 = vcvt.s32.f32 %v1504
      %v1537 = vcvt.s32.f32 %v1505
      %v1538 = vcvt.s32.f32 %v1506
      %v1539 = vcvt.s32.f32 %v1507
      %v1540 = vcvt.s32.f32 %v1508
      %v1541 = vcvt.s32.f32 %v1509
      %v1542 = vcvt.s32.f32 %v1510
      %v1543 = vadd.f32 %v1351, %v1511
      %v1544 = vadd.f32 %v1352, %v1512
      %v1545 = vadd.f32 %v1353, %v1513
      %v1546 = vadd.f32 %v1354, %v1514
      %v1547 = vadd.f32 %v1355, %v1515
      %v1548 = vadd.f32 %v1356, %v1516
      %v1549 = vadd.f32 %v1357, %v1517
      %v1550 = vadd.f32 %v1358, %v1518
      %v1551 = vadd.f32 %v1359, %v1519
      %v1552 = vadd.f32 %v1360, %v1520
      %v1553 = vadd.f32 %v1361, %v1521
      %v1554 = vadd.f32 %v1362, %v1522
      %v1555 = vadd.f32 %v1363, %v1523
      %v1556 = vadd.f32 %v1364, %v1524
      %v1557 = vadd.f32 %v1365, %v1525
      %v1558 = vadd.f32 %v1366, %v1526
      %v1559 = vadd.f32 %v1367, %v1527
      %v1560 = vadd.f32 %v1368, %v1528
      %v1561 = vadd.f32 %v1369, %v1529
      %v1562 = vadd.f32 %v1370, %v1530
      %v1563 = vadd.f32 %v1371, %v1531
      %v1564 = vadd.f32 %v1372, %v1532
      %v1565 = vadd.f32 %v1373, %v1533
      %v1566 = vadd.f32 %v1374, %v1534
      %v1567 = vadd.f32 %v1375, %v1535
      %v1568 = vadd.f32 %v1376, %v1536
      %v1569 = vadd.f32 %v1377, %v1537
      %v1570 = vadd.f32 %v1378, %v1538
      %v1571 = vadd.f32 %v1379, %v1539
      %v1572 = vadd.f32 %v1380, %v1540
      %v1573 = vadd.f32 %v1381, %v1541
      %v1574 = vadd.f32 %v1382, %v1542
      %v1575 = vadd.s32 %v228, 224
      %v1576 = vadd.s32 %v229, 224
      %v1577 = vadd.s32 %v230, 224
      %v1578 = vadd.s32 %v231, 224
      %v1579 = vadd.s32 %v232, 224
      %v1580 = vadd.s32 %v233, 224
      %v1581 = vadd.s32 %v234, 224
      %v1582 = vadd.s32 %v235, 224
      %v1583 = vadd.s32 %v236, 224
      %v1584 = vadd.s32 %v237, 224
      %v1585 = vadd.s32 %v238, 224
      %v1586 = vadd.s32 %v239, 224
      %v1587 = vadd.s32 %v240, 224
      %v1588 = vadd.s32 %v241, 224
      %v1589 = vadd.s32 %v242, 224
      %v1590 = vadd.s32 %v243, 224
      %1591 = vset.pattern.permute.xlu0 7
      %1592 = vperm.xlu0 %1591, %v1575
      %v1593 = vpop.permute.xlu0 %1592
      %1594 = vset.pattern.permute.xlu0 7
      %1595 = vperm.xlu0 %1594, %v1576
      %v1596 = vpop.permute.xlu0 %1595
      %1597 = vset.pattern.permute.xlu0 7
      %1598 = vperm.xlu0 %1597, %v1577
      %v1599 = vpop.permute.xlu0 %1598
      %1600 = vset.pattern.permute.xlu0 7
      %1601 = vperm.xlu0 %1600, %v1578
      %v1602 = vpop.permute.xlu0 %1601
      %1603 = vset.pattern.permute.xlu0 7
      %1604 = vperm.xlu0 %1603, %v1579
      %v1605 = vpop.permute.xlu0 %1604
      %1606 = vset.pattern.permute.xlu0 7
      %1607 = vperm.xlu0 %1606, %v1580
      %v1608 = vpop.permute.xlu0 %1607
      %1609 = vset.pattern.permute.xlu0 7
      %1610 = vperm.xlu0 %1609, %v1581
      %v1611 = vpop.permute.xlu0 %1610
      %1612 = vset.pattern.permute.xlu0 7
      %1613 = vperm.xlu0 %1612, %v1582
      %v1614 = vpop.permute.xlu0 %1613
      %1615 = vset.pattern.permute.xlu0 7
      %1616 = vperm.xlu0 %1615, %v1583
      %v1617 = vpop.permute.xlu0 %1616
      %1618 = vset.pattern.permute.xlu0 7
      %1619 = vperm.xlu0 %1618, %v1584
      %v1620 = vpop.permute.xlu0 %1619
      %1621 = vset.pattern.permute.xlu0 7
      %1622 = vperm.xlu0 %1621, %v1585
      %v1623 = vpop.permute.xlu0 %1622
      %1624 = vset.pattern.permute.xlu0 7
      %1625 = vperm.xlu0 %1624, %v1586
      %v1626 = vpop.permute.xlu0 %1625
      %1627 = vset.pattern.permute.xlu0 7
      %1628 = vperm.xlu0 %1627, %v1587
      %v1629 = vpop.permute.xlu0 %1628
      %1630 = vset.pattern.permute.xlu0 7
      %1631 = vperm.xlu0 %1630, %v1588
      %v1632 = vpop.permute.xlu0 %1631
      %1633 = vset.pattern.permute.xlu0 7
      %1634 = vperm.xlu0 %1633, %v1589
      %v1635 = vpop.permute.xlu0 %1634
      %1636 = vset.pattern.permute.xlu0 7
      %1637 = vperm.xlu0 %1636, %v1590
      %v1638 = vpop.permute.xlu0 %1637
      %vm1639 = vcmp.eq.s32.totalorder %v245, %v1593
      %vm1640 = vcmp.eq.s32.totalorder %v246, %v1593
      %vm1641 = vcmp.eq.s32.totalorder %v245, %v1596
      %vm1642 = vcmp.eq.s32.totalorder %v246, %v1596
      %vm1643 = vcmp.eq.s32.totalorder %v245, %v1599
      %vm1644 = vcmp.eq.s32.totalorder %v246, %v1599
      %vm1645 = vcmp.eq.s32.totalorder %v245, %v1602
      %vm1646 = vcmp.eq.s32.totalorder %v246, %v1602
      %vm1647 = vcmp.eq.s32.totalorder %v245, %v1605
      %vm1648 = vcmp.eq.s32.totalorder %v246, %v1605
      %vm1649 = vcmp.eq.s32.totalorder %v245, %v1608
      %vm1650 = vcmp.eq.s32.totalorder %v246, %v1608
      %vm1651 = vcmp.eq.s32.totalorder %v245, %v1611
      %vm1652 = vcmp.eq.s32.totalorder %v246, %v1611
      %vm1653 = vcmp.eq.s32.totalorder %v245, %v1614
      %vm1654 = vcmp.eq.s32.totalorder %v246, %v1614
      %vm1655 = vcmp.eq.s32.totalorder %v245, %v1617
      %vm1656 = vcmp.eq.s32.totalorder %v246, %v1617
      %vm1657 = vcmp.eq.s32.totalorder %v245, %v1620
      %vm1658 = vcmp.eq.s32.totalorder %v246, %v1620
      %vm1659 = vcmp.eq.s32.totalorder %v245, %v1623
      %vm1660 = vcmp.eq.s32.totalorder %v246, %v1623
      %vm1661 = vcmp.eq.s32.totalorder %v245, %v1626
      %vm1662 = vcmp.eq.s32.totalorder %v246, %v1626
      %vm1663 = vcmp.eq.s32.totalorder %v245, %v1629
      %vm1664 = vcmp.eq.s32.totalorder %v246, %v1629
      %vm1665 = vcmp.eq.s32.totalorder %v245, %v1632
      %vm1666 = vcmp.eq.s32.totalorder %v246, %v1632
      %vm1667 = vcmp.eq.s32.totalorder %v245, %v1635
      %vm1668 = vcmp.eq.s32.totalorder %v246, %v1635
      %vm1669 = vcmp.eq.s32.totalorder %v245, %v1638
      %vm1670 = vcmp.eq.s32.totalorder %v246, %v1638
      %v1671 = vsel %vm1639, 1, 0
      %v1672 = vsel %vm1640, 1, 0
      %v1673 = vsel %vm1641, 1, 0
      %v1674 = vsel %vm1642, 1, 0
      %v1675 = vsel %vm1643, 1, 0
      %v1676 = vsel %vm1644, 1, 0
      %v1677 = vsel %vm1645, 1, 0
      %v1678 = vsel %vm1646, 1, 0
      %v1679 = vsel %vm1647, 1, 0
      %v1680 = vsel %vm1648, 1, 0
      %v1681 = vsel %vm1649, 1, 0
      %v1682 = vsel %vm1650, 1, 0
      %v1683 = vsel %vm1651, 1, 0
      %v1684 = vsel %vm1652, 1, 0
      %v1685 = vsel %vm1653, 1, 0
      %v1686 = vsel %vm1654, 1, 0
      %v1687 = vsel %vm1655, 1, 0
      %v1688 = vsel %vm1656, 1, 0
      %v1689 = vsel %vm1657, 1, 0
      %v1690 = vsel %vm1658, 1, 0
      %v1691 = vsel %vm1659, 1, 0
      %v1692 = vsel %vm1660, 1, 0
      %v1693 = vsel %vm1661, 1, 0
      %v1694 = vsel %vm1662, 1, 0
      %v1695 = vsel %vm1663, 1, 0
      %v1696 = vsel %vm1664, 1, 0
      %v1697 = vsel %vm1665, 1, 0
      %v1698 = vsel %vm1666, 1, 0
      %v1699 = vsel %vm1667, 1, 0
      %v1700 = vsel %vm1668, 1, 0
      %v1701 = vsel %vm1669, 1, 0
      %v1702 = vsel %vm1670, 1, 0
      %v1703 = vcvt.s32.f32 %v1671
      %v1704 = vcvt.s32.f32 %v1672
      %v1705 = vcvt.s32.f32 %v1673
      %v1706 = vcvt.s32.f32 %v1674
      %v1707 = vcvt.s32.f32 %v1675
      %v1708 = vcvt.s32.f32 %v1676
      %v1709 = vcvt.s32.f32 %v1677
      %v1710 = vcvt.s32.f32 %v1678
      %v1711 = vcvt.s32.f32 %v1679
      %v1712 = vcvt.s32.f32 %v1680
      %v1713 = vcvt.s32.f32 %v1681
      %v1714 = vcvt.s32.f32 %v1682
      %v1715 = vcvt.s32.f32 %v1683
      %v1716 = vcvt.s32.f32 %v1684
      %v1717 = vcvt.s32.f32 %v1685
      %v1718 = vcvt.s32.f32 %v1686
      %v1719 = vcvt.s32.f32 %v1687
      %v1720 = vcvt.s32.f32 %v1688
      %v1721 = vcvt.s32.f32 %v1689
      %v1722 = vcvt.s32.f32 %v1690
      %v1723 = vcvt.s32.f32 %v1691
      %v1724 = vcvt.s32.f32 %v1692
      %v1725 = vcvt.s32.f32 %v1693
      %v1726 = vcvt.s32.f32 %v1694
      %v1727 = vcvt.s32.f32 %v1695
      %v1728 = vcvt.s32.f32 %v1696
      %v1729 = vcvt.s32.f32 %v1697
      %v1730 = vcvt.s32.f32 %v1698
      %v1731 = vcvt.s32.f32 %v1699
      %v1732 = vcvt.s32.f32 %v1700
      %v1733 = vcvt.s32.f32 %v1701
      %v1734 = vcvt.s32.f32 %v1702
      %v1735 = vadd.f32 %v1543, %v1703
      %v1736 = vadd.f32 %v1544, %v1704
      %v1737 = vadd.f32 %v1545, %v1705
      %v1738 = vadd.f32 %v1546, %v1706
      %v1739 = vadd.f32 %v1547, %v1707
      %v1740 = vadd.f32 %v1548, %v1708
      %v1741 = vadd.f32 %v1549, %v1709
      %v1742 = vadd.f32 %v1550, %v1710
      %v1743 = vadd.f32 %v1551, %v1711
      %v1744 = vadd.f32 %v1552, %v1712
      %v1745 = vadd.f32 %v1553, %v1713
      %v1746 = vadd.f32 %v1554, %v1714
      %v1747 = vadd.f32 %v1555, %v1715
      %v1748 = vadd.f32 %v1556, %v1716
      %v1749 = vadd.f32 %v1557, %v1717
      %v1750 = vadd.f32 %v1558, %v1718
      %v1751 = vadd.f32 %v1559, %v1719
      %v1752 = vadd.f32 %v1560, %v1720
      %v1753 = vadd.f32 %v1561, %v1721
      %v1754 = vadd.f32 %v1562, %v1722
      %v1755 = vadd.f32 %v1563, %v1723
      %v1756 = vadd.f32 %v1564, %v1724
      %v1757 = vadd.f32 %v1565, %v1725
      %v1758 = vadd.f32 %v1566, %v1726
      %v1759 = vadd.f32 %v1567, %v1727
      %v1760 = vadd.f32 %v1568, %v1728
      %v1761 = vadd.f32 %v1569, %v1729
      %v1762 = vadd.f32 %v1570, %v1730
      %v1763 = vadd.f32 %v1571, %v1731
      %v1764 = vadd.f32 %v1572, %v1732
      %v1765 = vadd.f32 %v1573, %v1733
      %v1766 = vadd.f32 %v1574, %v1734
      %v1767 = vld [vmem:[%s1] sm:$0xff]
      %v1768 = vld [vmem:[%s1 + $0x8] sm:$0xff]
      %v1769 = vld [vmem:[%s1 + $0x10] sm:$0xff]
      %v1770 = vld [vmem:[%s1 + $0x18] sm:$0xff]
      %v1771 = vld [vmem:[%s1 + $0x20] sm:$0xff]
      %v1772 = vld [vmem:[%s1 + $0x28] sm:$0xff]
      %v1773 = vld [vmem:[%s1 + $0x30] sm:$0xff]
      %v1774 = vld [vmem:[%s1 + $0x38] sm:$0xff]
      %v1775 = vld [vmem:[%s1 + $0x40] sm:$0xff]
      %v1776 = vld [vmem:[%s1 + $0x48] sm:$0xff]
      %v1777 = vld [vmem:[%s1 + $0x50] sm:$0xff]
      %v1778 = vld [vmem:[%s1 + $0x58] sm:$0xff]
      %v1779 = vld [vmem:[%s1 + $0x60] sm:$0xff]
      %v1780 = vld [vmem:[%s1 + $0x68] sm:$0xff]
      %v1781 = vld [vmem:[%s1 + $0x70] sm:$0xff]
      %v1782 = vld [vmem:[%s1 + $0x78] sm:$0xff]
      %v1783 = vld [vmem:[%s1 + $0x80] sm:$0xff]
      %v1784 = vld [vmem:[%s1 + $0x88] sm:$0xff]
      %v1785 = vld [vmem:[%s1 + $0x90] sm:$0xff]
      %v1786 = vld [vmem:[%s1 + $0x98] sm:$0xff]
      %v1787 = vld [vmem:[%s1 + $0xa0] sm:$0xff]
      %v1788 = vld [vmem:[%s1 + $0xa8] sm:$0xff]
      %v1789 = vld [vmem:[%s1 + $0xb0] sm:$0xff]
      %v1790 = vld [vmem:[%s1 + $0xb8] sm:$0xff]
      %v1791 = vld [vmem:[%s1 + $0xc0] sm:$0xff]
      %v1792 = vld [vmem:[%s1 + $0xc8] sm:$0xff]
      %v1793 = vld [vmem:[%s1 + $0xd0] sm:$0xff]
      %v1794 = vld [vmem:[%s1 + $0xd8] sm:$0xff]
      %v1795 = vld [vmem:[%s1 + $0xe0] sm:$0xff]
      %v1796 = vld [vmem:[%s1 + $0xe8] sm:$0xff]
      %v1797 = vld [vmem:[%s1 + $0xf0] sm:$0xff]
      %v1798 = vld [vmem:[%s1 + $0xf8] sm:$0xff]
      %v1799 = vld [vmem:[%s2] sm:$0x1]
      %v1801 = vlaneseq
      %v1802 = vshrl.u32 %v1801, 7
      %v1803 = vsub.s32 0, %v1802
      %v1804 = vrot.slane %v1799, %v1803
      %1806 = vmatprep.subr.mxu0 0.0
      %1807 = vmatpush1.msra.mxu0 %v1767
      %1808 = vmatprep.subr.mxu0 0.0
      %1809 = vmatpush1.msra.mxu0 %v1768
      %1810 = vmatprep.subr.mxu0 0.0
      %1811 = vmatpush1.msra.mxu0 %v1769
      %1812 = vmatprep.subr.mxu0 0.0
      %1813 = vmatpush1.msra.mxu0 %v1770
      %1814 = vmatprep.subr.mxu0 0.0
      %1815 = vmatpush1.msra.mxu0 %v1771
      %1816 = vmatprep.subr.mxu0 0.0
      %1817 = vmatpush1.msra.mxu0 %v1772
      %1818 = vmatprep.subr.mxu0 0.0
      %1819 = vmatpush1.msra.mxu0 %v1773
      %1820 = vmatprep.subr.mxu0 0.0
      %1821 = vmatpush1.msra.mxu0 %v1774
      %1822 = vmatprep.subr.mxu0 0.0
      %1823 = vmatpush1.msra.mxu0 %v1775
      %1824 = vmatprep.subr.mxu0 0.0
      %1825 = vmatpush1.msra.mxu0 %v1776
      %1826 = vmatprep.subr.mxu0 0.0
      %1827 = vmatpush1.msra.mxu0 %v1777
      %1828 = vmatprep.subr.mxu0 0.0
      %1829 = vmatpush1.msra.mxu0 %v1778
      %1830 = vmatprep.subr.mxu0 0.0
      %1831 = vmatpush1.msra.mxu0 %v1779
      %1832 = vmatprep.subr.mxu0 0.0
      %1833 = vmatpush1.msra.mxu0 %v1780
      %1834 = vmatprep.subr.mxu0 0.0
      %1835 = vmatpush1.msra.mxu0 %v1781
      %1836 = vmatprep.subr.mxu0 0.0
      %1837 = vmatpush1.msra.mxu0 %v1782
      %1838 = vmatprep.subr.mxu0 0.0
      %1839 = vmatpush1.msra.mxu0 %v1783
      %1840 = vmatprep.subr.mxu0 0.0
      %1841 = vmatpush1.msra.mxu0 %v1784
      %1842 = vmatprep.subr.mxu0 0.0
      %1843 = vmatpush1.msra.mxu0 %v1785
      %1844 = vmatprep.subr.mxu0 0.0
      %1845 = vmatpush1.msra.mxu0 %v1786
      %1846 = vmatprep.subr.mxu0 0.0
      %1847 = vmatpush1.msra.mxu0 %v1787
      %1848 = vmatprep.subr.mxu0 0.0
      %1849 = vmatpush1.msra.mxu0 %v1788
      %1850 = vmatprep.subr.mxu0 0.0
      %1851 = vmatpush1.msra.mxu0 %v1789
      %1852 = vmatprep.subr.mxu0 0.0
      %1853 = vmatpush1.msra.mxu0 %v1790
      %1854 = vmatprep.subr.mxu0 0.0
      %1855 = vmatpush1.msra.mxu0 %v1791
      %1856 = vmatprep.subr.mxu0 0.0
      %1857 = vmatpush1.msra.mxu0 %v1792
      %1858 = vmatprep.subr.mxu0 0.0
      %1859 = vmatpush1.msra.mxu0 %v1793
      %1860 = vmatprep.subr.mxu0 0.0
      %1861 = vmatpush1.msra.mxu0 %v1794
      %1862 = vmatprep.subr.mxu0 0.0
      %1863 = vmatpush1.msra.mxu0 %v1795
      %1864 = vmatprep.subr.mxu0 0.0
      %1865 = vmatpush1.msra.mxu0 %v1796
      %1866 = vmatprep.subr.mxu0 0.0
      %1867 = vmatpush1.msra.mxu0 %v1797
      %1868 = vmatprep.subr.mxu0 0.0
      %1869 = vmatpush1.msra.mxu0 %v1798
      %1870 = vmatprep.mubr.f32.mxu0 %v1736
      %1871 = vmatmul.mubr.f32.gmra.mrb[0].mxu0 %v1735
      %v1872 = vpop.f32.mrb[0].mxu0
      %v1873 = vadd.f32 %v1804, %v1872
      %v1874 = vpop.f32.mrb[0].mxu0
      %1875 = vmatprep.mubr.f32.mxu0 %v1738
      %1876 = vmatmul.mubr.f32.gmra.mrb[0].mxu0 %v1737
      %v1877 = vpop.f32.mrb[0].mxu0
      %v1878 = vadd.f32 %v1804, %v1877
      %v1879 = vpop.f32.mrb[0].mxu0
      %1880 = vmatprep.mubr.f32.mxu0 %v1740
      %1881 = vmatmul.mubr.f32.gmra.mrb[0].mxu0 %v1739
      %v1882 = vpop.f32.mrb[0].mxu0
      %v1883 = vadd.f32 %v1804, %v1882
      %v1884 = vpop.f32.mrb[0].mxu0
      %1885 = vmatprep.mubr.f32.mxu0 %v1742
      %1886 = vmatmul.mubr.f32.gmra.mrb[0].mxu0 %v1741
      %v1887 = vpop.f32.mrb[0].mxu0
      %v1888 = vadd.f32 %v1804, %v1887
      %v1889 = vpop.f32.mrb[0].mxu0
      %1890 = vmatprep.mubr.f32.mxu0 %v1744
      %1891 = vmatmul.mubr.f32.gmra.mrb[0].mxu0 %v1743
      %v1892 = vpop.f32.mrb[0].mxu0
      %v1893 = vadd.f32 %v1804, %v1892
      %v1894 = vpop.f32.mrb[0].mxu0
      %1895 = vmatprep.mubr.f32.mxu0 %v1746
      %1896 = vmatmul.mubr.f32.gmra.mrb[0].mxu0 %v1745
      %v1897 = vpop.f32.mrb[0].mxu0
      %v1898 = vadd.f32 %v1804, %v1897
      %v1899 = vpop.f32.mrb[0].mxu0
      %1900 = vmatprep.mubr.f32.mxu0 %v1748
      %1901 = vmatmul.mubr.f32.gmra.mrb[0].mxu0 %v1747
      %v1902 = vpop.f32.mrb[0].mxu0
      %v1903 = vadd.f32 %v1804, %v1902
      %v1904 = vpop.f32.mrb[0].mxu0
      %1905 = vmatprep.mubr.f32.mxu0 %v1750
      %1906 = vmatmul.mubr.f32.gmra.mrb[0].mxu0 %v1749
      %v1907 = vpop.f32.mrb[0].mxu0
      %v1908 = vadd.f32 %v1804, %v1907
      %v1909 = vpop.f32.mrb[0].mxu0
      %1910 = vmatprep.mubr.f32.mxu0 %v1752
      %1911 = vmatmul.mubr.f32.gmra.mrb[0].mxu0 %v1751
      %v1912 = vpop.f32.mrb[0].mxu0
      %v1913 = vadd.f32 %v1804, %v1912
      %v1914 = vpop.f32.mrb[0].mxu0
      %1915 = vmatprep.mubr.f32.mxu0 %v1754
      %1916 = vmatmul.mubr.f32.gmra.mrb[0].mxu0 %v1753
      %v1917 = vpop.f32.mrb[0].mxu0
      %v1918 = vadd.f32 %v1804, %v1917
      %v1919 = vpop.f32.mrb[0].mxu0
      %1920 = vmatprep.mubr.f32.mxu0 %v1756
      %1921 = vmatmul.mubr.f32.gmra.mrb[0].mxu0 %v1755
      %v1922 = vpop.f32.mrb[0].mxu0
      %v1923 = vadd.f32 %v1804, %v1922
      %v1924 = vpop.f32.mrb[0].mxu0
      %1925 = vmatprep.mubr.f32.mxu0 %v1758
      %1926 = vmatmul.mubr.f32.gmra.mrb[0].mxu0 %v1757
      %v1927 = vpop.f32.mrb[0].mxu0
      %v1928 = vadd.f32 %v1804, %v1927
      %v1929 = vpop.f32.mrb[0].mxu0
      %1930 = vmatprep.mubr.f32.mxu0 %v1760
      %1931 = vmatmul.mubr.f32.gmra.mrb[0].mxu0 %v1759
      %v1932 = vpop.f32.mrb[0].mxu0
      %v1933 = vadd.f32 %v1804, %v1932
      %v1934 = vpop.f32.mrb[0].mxu0
      %1935 = vmatprep.mubr.f32.mxu0 %v1762
      %1936 = vmatmul.mubr.f32.gmra.mrb[0].mxu0 %v1761
      %v1937 = vpop.f32.mrb[0].mxu0
      %v1938 = vadd.f32 %v1804, %v1937
      %v1939 = vpop.f32.mrb[0].mxu0
      %1940 = vmatprep.mubr.f32.mxu0 %v1764
      %1941 = vmatmul.mubr.f32.gmra.mrb[0].mxu0 %v1763
      %v1942 = vpop.f32.mrb[0].mxu0
      %v1943 = vadd.f32 %v1804, %v1942
      %v1944 = vpop.f32.mrb[0].mxu0
      %1945 = vmatprep.mubr.f32.mxu0 %v1766
      %1946 = vmatmul.mubr.f32.gmra.mrb[0].mxu0 %v1765
      %v1947 = vpop.f32.mrb[0].mxu0
      %v1948 = vadd.f32 %v1804, %v1947
      %v1949 = vpop.f32.mrb[0].mxu0
      %1950 = vdwg.mxu0
      %v1951 = vmax.f32 %v1873, 0.0
      %v1952 = vmax.f32 %v1878, 0.0
      %v1953 = vmax.f32 %v1883, 0.0
      %v1954 = vmax.f32 %v1888, 0.0
      %v1955 = vmax.f32 %v1893, 0.0
      %v1956 = vmax.f32 %v1898, 0.0
      %v1957 = vmax.f32 %v1903, 0.0
      %v1958 = vmax.f32 %v1908, 0.0
      %v1959 = vmax.f32 %v1913, 0.0
      %v1960 = vmax.f32 %v1918, 0.0
      %v1961 = vmax.f32 %v1923, 0.0
      %v1962 = vmax.f32 %v1928, 0.0
      %v1963 = vmax.f32 %v1933, 0.0
      %v1964 = vmax.f32 %v1938, 0.0
      %v1965 = vmax.f32 %v1943, 0.0
      %v1966 = vmax.f32 %v1948, 0.0
      %v1967 = vld [vmem:[%s3] sm:$0xff]
      %v1968 = vld [vmem:[%s3 + $0x8] sm:$0xff]
      %v1969 = vld [vmem:[%s3 + $0x10] sm:$0xff]
      %v1970 = vld [vmem:[%s3 + $0x18] sm:$0xff]
      %v1971 = vld [vmem:[%s4] sm:$0x1]
      %v1973 = vlaneseq
      %v1974 = vshrl.u32 %v1973, 7
      %v1975 = vsub.s32 0, %v1974
      %v1976 = vrot.slane %v1971, %v1975
      %vm1978 = vcmask 261120
      %v1980 = vsel %vm1978, %v1951, 0
      %v1983 = vsel %vm1978, %v1952, 0
      %v1986 = vsel %vm1978, %v1953, 0
      %v1989 = vsel %vm1978, %v1954, 0
      %v1992 = vsel %vm1978, %v1955, 0
      %v1995 = vsel %vm1978, %v1956, 0
      %v1998 = vsel %vm1978, %v1957, 0
      %v2001 = vsel %vm1978, %v1958, 0
      %v2004 = vsel %vm1978, %v1959, 0
      %v2007 = vsel %vm1978, %v1960, 0
      %v2010 = vsel %vm1978, %v1961, 0
      %v2013 = vsel %vm1978, %v1962, 0
      %v2016 = vsel %vm1978, %v1963, 0
      %v2019 = vsel %vm1978, %v1964, 0
      %v2022 = vsel %vm1978, %v1965, 0
      %v2025 = vsel %vm1978, %v1966, 0
      %2027 = vmatprep.subr.mxu0 0.0
      %2028 = vmatpush1.msra.mxu0 %v1967
      %2029 = vmatprep.subr.mxu0 0.0
      %2030 = vmatpush1.msra.mxu0 %v1968
      %2031 = vmatprep.subr.mxu0 0.0
      %2032 = vmatpush1.msra.mxu0 %v1969
      %2033 = vmatprep.subr.mxu0 0.0
      %2034 = vmatpush1.msra.mxu0 %v1970
      %2035 = vmatprep.subr.mxu0 0.0
      %2036 = vmatpush1.msra.mxu0 0.0
      %2037 = vmatprep.subr.mxu0 0.0
      %2038 = vmatpush1.msra.mxu0 0.0
      %2039 = vmatprep.subr.mxu0 0.0
      %2040 = vmatpush1.msra.mxu0 0.0
      %2041 = vmatprep.subr.mxu0 0.0
      %2042 = vmatpush1.msra.mxu0 0.0
      %2043 = vmatprep.subr.mxu0 0.0
      %2044 = vmatpush1.msra.mxu0 0.0
      %2045 = vmatprep.subr.mxu0 0.0
      %2046 = vmatpush1.msra.mxu0 0.0
      %2047 = vmatprep.subr.mxu0 0.0
      %2048 = vmatpush1.msra.mxu0 0.0
      %2049 = vmatprep.subr.mxu0 0.0
      %2050 = vmatpush1.msra.mxu0 0.0
      %2051 = vmatprep.subr.mxu0 0.0
      %2052 = vmatpush1.msra.mxu0 0.0
      %2053 = vmatprep.subr.mxu0 0.0
      %2054 = vmatpush1.msra.mxu0 0.0
      %2055 = vmatprep.subr.mxu0 0.0
      %2056 = vmatpush1.msra.mxu0 0.0
      %2057 = vmatprep.subr.mxu0 0.0
      %2058 = vmatpush1.msra.mxu0 0.0
      %2059 = vmatprep.subr.mxu0 0.0
      %2060 = vmatpush1.msra.mxu0 0.0
      %2061 = vmatprep.subr.mxu0 0.0
      %2062 = vmatpush1.msra.mxu0 0.0
      %2063 = vmatprep.subr.mxu0 0.0
      %2064 = vmatpush1.msra.mxu0 0.0
      %2065 = vmatprep.subr.mxu0 0.0
      %2066 = vmatpush1.msra.mxu0 0.0
      %2067 = vmatprep.subr.mxu0 0.0
      %2068 = vmatpush1.msra.mxu0 0.0
      %2069 = vmatprep.subr.mxu0 0.0
      %2070 = vmatpush1.msra.mxu0 0.0
      %2071 = vmatprep.subr.mxu0 0.0
      %2072 = vmatpush1.msra.mxu0 0.0
      %2073 = vmatprep.subr.mxu0 0.0
      %2074 = vmatpush1.msra.mxu0 0.0
      %2075 = vmatprep.subr.mxu0 0.0
      %2076 = vmatpush1.msra.mxu0 0.0
      %2077 = vmatprep.subr.mxu0 0.0
      %2078 = vmatpush1.msra.mxu0 0.0
      %2079 = vmatprep.subr.mxu0 0.0
      %2080 = vmatpush1.msra.mxu0 0.0
      %2081 = vmatprep.subr.mxu0 0.0
      %2082 = vmatpush1.msra.mxu0 0.0
      %2083 = vmatprep.subr.mxu0 0.0
      %2084 = vmatpush1.msra.mxu0 0.0
      %2085 = vmatprep.subr.mxu0 0.0
      %2086 = vmatpush1.msra.mxu0 0.0
      %2087 = vmatprep.subr.mxu0 0.0
      %2088 = vmatpush1.msra.mxu0 0.0
      %2089 = vmatprep.subr.mxu0 0.0
      %2090 = vmatpush1.msra.mxu0 0.0
      %2091 = vmatprep.mubr.f32.mxu0 0.0
      %2092 = vmatmul.mubr.f32.gmra.mrb[0].mxu0 %v1980
      %v2093 = vpop.f32.mrb[0].mxu0
      %v2094 = vadd.f32 %v1976, %v2093
      %v2095 = vpop.f32.mrb[0].mxu0
      %2096 = vmatprep.mubr.f32.mxu0 0.0
      %2097 = vmatmul.mubr.f32.gmra.mrb[0].mxu0 %v1983
      %v2098 = vpop.f32.mrb[0].mxu0
      %v2099 = vadd.f32 %v1976, %v2098
      %v2100 = vpop.f32.mrb[0].mxu0
      %2101 = vmatprep.mubr.f32.mxu0 0.0
      %2102 = vmatmul.mubr.f32.gmra.mrb[0].mxu0 %v1986
      %v2103 = vpop.f32.mrb[0].mxu0
      %v2104 = vadd.f32 %v1976, %v2103
      %v2105 = vpop.f32.mrb[0].mxu0
      %2106 = vmatprep.mubr.f32.mxu0 0.0
      %2107 = vmatmul.mubr.f32.gmra.mrb[0].mxu0 %v1989
      %v2108 = vpop.f32.mrb[0].mxu0
      %v2109 = vadd.f32 %v1976, %v2108
      %v2110 = vpop.f32.mrb[0].mxu0
      %2111 = vmatprep.mubr.f32.mxu0 0.0
      %2112 = vmatmul.mubr.f32.gmra.mrb[0].mxu0 %v1992
      %v2113 = vpop.f32.mrb[0].mxu0
      %v2114 = vadd.f32 %v1976, %v2113
      %v2115 = vpop.f32.mrb[0].mxu0
      %2116 = vmatprep.mubr.f32.mxu0 0.0
      %2117 = vmatmul.mubr.f32.gmra.mrb[0].mxu0 %v1995
      %v2118 = vpop.f32.mrb[0].mxu0
      %v2119 = vadd.f32 %v1976, %v2118
      %v2120 = vpop.f32.mrb[0].mxu0
      %2121 = vmatprep.mubr.f32.mxu0 0.0
      %2122 = vmatmul.mubr.f32.gmra.mrb[0].mxu0 %v1998
      %v2123 = vpop.f32.mrb[0].mxu0
      %v2124 = vadd.f32 %v1976, %v2123
      %v2125 = vpop.f32.mrb[0].mxu0
      %2126 = vmatprep.mubr.f32.mxu0 0.0
      %2127 = vmatmul.mubr.f32.gmra.mrb[0].mxu0 %v2001
      %v2128 = vpop.f32.mrb[0].mxu0
      %v2129 = vadd.f32 %v1976, %v2128
      %v2130 = vpop.f32.mrb[0].mxu0
      %2131 = vmatprep.mubr.f32.mxu0 0.0
      %2132 = vmatmul.mubr.f32.gmra.mrb[0].mxu0 %v2004
      %v2133 = vpop.f32.mrb[0].mxu0
      %v2134 = vadd.f32 %v1976, %v2133
      %v2135 = vpop.f32.mrb[0].mxu0
      %2136 = vmatprep.mubr.f32.mxu0 0.0
      %2137 = vmatmul.mubr.f32.gmra.mrb[0].mxu0 %v2007
      %v2138 = vpop.f32.mrb[0].mxu0
      %v2139 = vadd.f32 %v1976, %v2138
      %v2140 = vpop.f32.mrb[0].mxu0
      %2141 = vmatprep.mubr.f32.mxu0 0.0
      %2142 = vmatmul.mubr.f32.gmra.mrb[0].mxu0 %v2010
      %v2143 = vpop.f32.mrb[0].mxu0
      %v2144 = vadd.f32 %v1976, %v2143
      %v2145 = vpop.f32.mrb[0].mxu0
      %2146 = vmatprep.mubr.f32.mxu0 0.0
      %2147 = vmatmul.mubr.f32.gmra.mrb[0].mxu0 %v2013
      %v2148 = vpop.f32.mrb[0].mxu0
      %v2149 = vadd.f32 %v1976, %v2148
      %v2150 = vpop.f32.mrb[0].mxu0
      %2151 = vmatprep.mubr.f32.mxu0 0.0
      %2152 = vmatmul.mubr.f32.gmra.mrb[0].mxu0 %v2016
      %v2153 = vpop.f32.mrb[0].mxu0
      %v2154 = vadd.f32 %v1976, %v2153
      %v2155 = vpop.f32.mrb[0].mxu0
      %2156 = vmatprep.mubr.f32.mxu0 0.0
      %2157 = vmatmul.mubr.f32.gmra.mrb[0].mxu0 %v2019
      %v2158 = vpop.f32.mrb[0].mxu0
      %v2159 = vadd.f32 %v1976, %v2158
      %v2160 = vpop.f32.mrb[0].mxu0
      %2161 = vmatprep.mubr.f32.mxu0 0.0
      %2162 = vmatmul.mubr.f32.gmra.mrb[0].mxu0 %v2022
      %v2163 = vpop.f32.mrb[0].mxu0
      %v2164 = vadd.f32 %v1976, %v2163
      %v2165 = vpop.f32.mrb[0].mxu0
      %2166 = vmatprep.mubr.f32.mxu0 0.0
      %2167 = vmatmul.mubr.f32.gmra.mrb[0].mxu0 %v2025
      %v2168 = vpop.f32.mrb[0].mxu0
      %v2169 = vadd.f32 %v1976, %v2168
      %v2170 = vpop.f32.mrb[0].mxu0
      %2171 = vdwg.mxu0
      %2172 = vst.msk [vmem:[%s226] sm:$0xff] %vm1978, %v2094
      %2173 = vst.msk [vmem:[%s226 + $0x8] sm:$0xff] %vm1978, %v2099
      %2174 = vst.msk [vmem:[%s226 + $0x10] sm:$0xff] %vm1978, %v2104
      %2175 = vst.msk [vmem:[%s226 + $0x18] sm:$0xff] %vm1978, %v2109
      %2176 = vst.msk [vmem:[%s226 + $0x20] sm:$0xff] %vm1978, %v2114
      %2177 = vst.msk [vmem:[%s226 + $0x28] sm:$0xff] %vm1978, %v2119
      %2178 = vst.msk [vmem:[%s226 + $0x30] sm:$0xff] %vm1978, %v2124
      %2179 = vst.msk [vmem:[%s226 + $0x38] sm:$0xff] %vm1978, %v2129
      %2180 = vst.msk [vmem:[%s226 + $0x40] sm:$0xff] %vm1978, %v2134
      %2181 = vst.msk [vmem:[%s226 + $0x48] sm:$0xff] %vm1978, %v2139
      %2182 = vst.msk [vmem:[%s226 + $0x50] sm:$0xff] %vm1978, %v2144
      %2183 = vst.msk [vmem:[%s226 + $0x58] sm:$0xff] %vm1978, %v2149
      %2184 = vst.msk [vmem:[%s226 + $0x60] sm:$0xff] %vm1978, %v2154
      %2185 = vst.msk [vmem:[%s226 + $0x68] sm:$0xff] %vm1978, %v2159
      %2186 = vst.msk [vmem:[%s226 + $0x70] sm:$0xff] %vm1978, %v2164
      %2187 = vst.msk [vmem:[%s226 + $0x78] sm:$0xff] %vm1978, %v2169
      %s2188 = smul.u32 16, %s16
      %p2189 = scmp.lt.s32.totalorder %s2188, 31
      %s2190 = scalar_select %p2189, %s2188, 31
      %s2191 = smul.addr %s2190, 8
      %s2192 = scalar_lea.vmem %s5, %s2191
      // Predicated region
      $region41: #{tpu_custom_call.1} parent=39 // pred_check
        %p2193 = pneg %p144
      $region42: #{tpu_custom_call.1} parent=39 // pred_check_branch
        %2195 = sbr.rel (%p2193) target = $region44
      $region43: #{tpu_custom_call.1} parent=39 // pred_region
        %s2196 = smul.u32 16, %s16
      $region44: #{tpu_custom_call.1} parent=39 // pred_fallthru
        _
    $region40: #{tpu_custom_call.1} parent=5 // pred_fallthru
      _
    %p2197 = scmp.le.s32.totalorder 2, %s11
    // Predicated region
    $region45: #{tpu_custom_call.1} parent=5 // pred_check
      %p2198 = pneg %p2197
    $region46: #{tpu_custom_call.1} parent=5 // pred_check_branch
      %2200 = sbr.rel (%p2198) target = $region48
    $region47: #{tpu_custom_call.1} parent=5 // pred_region
      %s2201 = ssub.s32 %s11, 2
      // Predicated region
      $region49: #{tpu_custom_call.1} parent=47 // pred_check
        %p2202 = pneg %p150
      $region50: #{tpu_custom_call.1} parent=47 // pred_check_branch
        %2204 = sbr.rel (%p2202) target = $region52
      $region51: #{tpu_custom_call.1} parent=47 // pred_region
        %s2205 = smul.u32 16, %s17
        %p2206 = scmp.lt.s32.totalorder %s2205, 31
        %s2207 = scalar_select %p2206, %s2205, 31
        %s2208 = smul.addr %s2207, 8
        %s2209 = scalar_lea.vmem %s5, %s2208
      $region52: #{tpu_custom_call.1} parent=47 // pred_fallthru
        _
    $region48: #{tpu_custom_call.1} parent=5 // pred_fallthru
      _
  $region6: #{tpu_custom_call.1} parent=0 // loop_footer
    %s15 = sadd.s32 1, %s11
  $region7: #{tpu_custom_call.1} parent=0 // loop_footer_branch
    %10 = sbr.rel target = $region3
  $region8: #{tpu_custom_call.1} parent=0 // loop_exit
    _

</llo_original>
